<compile_context>
chip_gen: v5e
topology: v5e:2x2
jax: 0.10.0
libtpu: 0.0.40
codegen_flags: <defaults>
</compile_context>

<pallas_src>
import functools
import math

import jax
import jax.numpy as jnp
from jax.experimental import pallas as pl
from jax.experimental.pallas import tpu as pltpu


def _mqa_flash_kernel(q_ref, k_ref, v_ref, wo_ref, y_ref,
                      m_ref, l_ref, acc_ref, *, n_heads, probs_dtype):
    # q_ref  : (1, H, tq, Dk)  pre-projected queries for this q tile
    # k_ref  : (1, tk, Dk)     pre-projected keys for this kv tile
    # v_ref  : (1, tk, Dv)     pre-projected values for this kv tile
    # wo_ref : (H*Dv, D)       fused output projection (row h*Dv+v -> col d)
    # y_ref  : (1, tq, D)
    # m/l    : (H*tq, 1) f32   online-softmax stats (lane-padded; accepted cost)
    # acc    : (H*tq, Dv) f32  unnormalized output accumulator
    H = n_heads
    tq = q_ref.shape[2]
    Dk = q_ref.shape[3]
    ki = pl.program_id(2)

    @pl.when(ki == 0)
    def _init():
        m_ref[...] = jnp.full(m_ref.shape, -jnp.inf, dtype=m_ref.dtype)
        l_ref[...] = jnp.zeros(l_ref.shape, dtype=l_ref.dtype)
        acc_ref[...] = jnp.zeros(acc_ref.shape, dtype=acc_ref.dtype)

    # Head-major query rows: row h*tq + n == (head h, query n).  Only leading
    # dims are merged (tq is a multiple of the sublane tile), so the reshape
    # is a layout no-op.
    q = q_ref[0].reshape(H * tq, Dk)                        # (H*tq, Dk)
    k = k_ref[0]                                            # (tk, Dk)
    v = v_ref[0]                                            # (tk, Dv)

    # Logits for ALL heads in one MXU matmul (MQA: K shared across heads).
    # NOTE: no 1/sqrt(Dk) scaling -- matches the reference PyTorch module.
    s = jax.lax.dot_general(q, k, (((1,), (1,)), ((), ())),
                            preferred_element_type=jnp.float32)   # (H*tq, tk)

    # Online softmax update.  Stats and accumulator stay f32; the exp itself
    # may run in bf16 (probs_dtype) for 2x EUP throughput on v6e/v7x.
    m_prev = m_ref[...]
    m_new = jnp.maximum(m_prev, jnp.max(s, axis=-1, keepdims=True))
    alpha = jnp.exp(m_prev - m_new)
    p = jnp.exp((s - m_new).astype(probs_dtype))            # (H*tq, tk)
    l_ref[...] = alpha * l_ref[...] + jnp.sum(
        p.astype(jnp.float32), axis=-1, keepdims=True)
    acc_ref[...] = alpha * acc_ref[...] + jnp.dot(
        p.astype(v.dtype), v, preferred_element_type=jnp.float32)  # (H*tq, Dv)
    m_ref[...] = m_new

    @pl.when(ki == pl.num_programs(2) - 1)
    def _finalize():
        # Normalize once (approximate EUP reciprocal, off the hot loop), put
        # heads side-by-side along lanes, and project back to D with ONE
        # matmul of contraction depth H*Dv (lane-dense D-wide output).
        o = acc_ref[...] * pl.reciprocal(l_ref[...], approx=True)  # (H*tq, Dv)
        o = o.astype(wo_ref.dtype)
        o2 = jnp.concatenate(
            [o[h * tq:(h + 1) * tq, :] for h in range(H)], axis=1)  # (tq, H*Dv)
        y = jnp.dot(o2, wo_ref[...], preferred_element_type=jnp.float32)
        y_ref[0] = y.astype(y_ref.dtype)


def mqa_forward(x, proj_q, proj_k, proj_v, proj_o, *, tile_q=256, tile_kv=256,
                probs_dtype=None, single_buffer_weights=True):
    """x: (B, N, D_in) -> (B, N, D_in).  Weights keep their PyTorch layouts."""
    B, N, D = x.shape
    H, _, Dk = proj_q.shape
    Dv = proj_v.shape[-1]

    tq = min(tile_q, N)
    tk = min(tile_kv, N)
    assert N % tq == 0 and N % tk == 0, "sequence length must divide the tiles"

    if probs_dtype is None:
        # bf16 exp only when the pipeline is already bf16 (v6e/v7x EUP is
        # bf16-capable; on v5e pass probs_dtype=jnp.float32 explicitly).
        probs_dtype = jnp.bfloat16 if x.dtype == jnp.bfloat16 else jnp.float32

    # Hoisted projections (plain XLA GEMMs, cheap for MQA) -- the kernel's kv
    # loop then streams small K/V tiles instead of full-D x rows.  HIGHEST
    # precision pins f32 parity with the reference; it is a no-op for bf16.
    hp = jax.lax.Precision.HIGHEST
    q = jnp.einsum('bnd,hdk->bhnk', x, proj_q, precision=hp).astype(x.dtype)
    k = jnp.einsum('bnd,dk->bnk', x, proj_k, precision=hp).astype(x.dtype)
    v = jnp.einsum('bnd,dv->bnv', x, proj_v, precision=hp).astype(x.dtype)
    # wo2[h*Dv + v, d] = proj_o[h, d, v]  -> single fused epilogue matmul.
    wo2 = jnp.transpose(proj_o, (0, 2, 1)).reshape(H * Dv, D).astype(x.dtype)

    # Wo never changes across the grid: single-buffer it (reclaims a full
    # weight-sized VMEM buffer; matters most under v7x's 64 MiB VMEM).
    wo_kwargs = {"pipeline_mode": pl.Buffered(1)} if single_buffer_weights else {}
    wo_spec = pl.BlockSpec((H * Dv, D), lambda b, qi, ki: (0, 0), **wo_kwargs)

    # Explicit scoped-VMEM budget: >= every chip's default scoped limit
    # (16 MiB on v5e), <= v7x's 64 MiB physical VMEM.
    item = jnp.dtype(x.dtype).itemsize
    pad = lambda n: max(((n + 127) // 128) * 128, 128)
    est = (2 * H * tq * pad(Dk) * item                      # q block (x2 bufs)
           + 2 * tk * (pad(Dk) + pad(Dv)) * item            # k + v blocks
           + (1 if single_buffer_weights else 2) * H * Dv * pad(D) * item  # Wo
           + 2 * tq * pad(D) * item                         # y block (x2 bufs)
           + 2 * H * tq * 128 * 4                           # m, l (lane-padded)
           + H * tq * pad(Dv) * 4)                          # acc f32
    vmem_limit = int(min(max(2 * est, 32 * 1024 * 1024), 64 * 1024 * 1024))

    kernel = functools.partial(_mqa_flash_kernel, n_heads=H,
                               probs_dtype=probs_dtype)

    return pl.pallas_call(
        kernel,
        out_shape=jax.ShapeDtypeStruct((B, N, D), x.dtype),
        grid_spec=pltpu.PrefetchScalarGridSpec(
            num_scalar_prefetch=0,
            grid=(B, N // tq, N // tk),
            in_specs=[
                # Q block index is independent of ki -> not re-DMA'd per kv step.
                pl.BlockSpec((1, H, tq, Dk), lambda b, qi, ki: (b, 0, qi, 0)),
                pl.BlockSpec((1, tk, Dk), lambda b, qi, ki: (b, ki, 0)),
                pl.BlockSpec((1, tk, Dv), lambda b, qi, ki: (b, ki, 0)),
                wo_spec,
            ],
            out_specs=pl.BlockSpec((1, tq, D), lambda b, qi, ki: (b, qi, 0)),
            scratch_shapes=[
                pltpu.VMEM((H * tq, 1), jnp.float32),    # running max m
                pltpu.VMEM((H * tq, 1), jnp.float32),    # running sum l
                pltpu.VMEM((H * tq, Dv), jnp.float32),   # unnormalized output
            ],
        ),
        compiler_params=pltpu.CompilerParams(
            dimension_semantics=("parallel", "parallel", "arbitrary"),
            vmem_limit_bytes=vmem_limit),
    )(q, k, v, wo2)


def _kaiming_uniform(key, shape):
    # Deterministic stand-in for torch.nn.init.kaiming_uniform_ (a=0, fan_in):
    # fan_in = prod(shape[1:]); bound = sqrt(2) * sqrt(3 / fan_in)
    fan_in = 1
    for s in shape[1:]:
        fan_in *= s
    bound = math.sqrt(2.0) * math.sqrt(3.0 / fan_in)
    return jax.random.uniform(key, shape, jnp.float32, -bound, bound)


def _mqa_reference(x, proj_q, proj_k, proj_v, proj_o):
    hp = jax.lax.Precision.HIGHEST
    Q = jnp.einsum('bnd,hdk->bhnk', x, proj_q, precision=hp)
    K = jnp.einsum('bmd,dk->bmk', x, proj_k, precision=hp)
    V = jnp.einsum('bmd,dv->bmv', x, proj_v, precision=hp)
    logits = jnp.einsum('bhnk,bmk->bhnm', Q, K, precision=hp)
    weights = jax.nn.softmax(logits, axis=-1)
    O = jnp.einsum('bhnm,bmv->bhnv', weights, V, precision=hp)
    return jnp.einsum('bhnv,hdv->bnd', O, proj_o, precision=hp)


if __name__ == "__main__":
    B, N = 2, 8          # batch, sequence length
    dim_in, dim_k, dim_v = 32, 16, 16
    n_query = 8

    key = jax.random.PRNGKey(0)
    kx, kq, kk, kv, ko = jax.random.split(key, 5)

    # f32 demo for exact parity with the reference; production should feed
    # bf16 x / weights end-to-end (the kernel is dtype-agnostic).
    x = jax.random.normal(kx, (B, N, dim_in), jnp.float32)
    proj_q = _kaiming_uniform(kq, (n_query, dim_in, dim_k))
    proj_k = _kaiming_uniform(kk, (dim_in, dim_k))
    proj_v = _kaiming_uniform(kv, (dim_in, dim_v))
    proj_o = _kaiming_uniform(ko, (n_query, dim_in, dim_v))

    try:
        y = jax.block_until_ready(mqa_forward(x, proj_q, proj_k, proj_v, proj_o))
    except Exception:
        # pl.Buffered(1) single-buffering of the constant Wo operand is a pure
        # VMEM optimization; fall back to default double buffering if this JAX
        # build does not support pipeline_mode on pallas_call BlockSpecs.
        y = jax.block_until_ready(
            mqa_forward(x, proj_q, proj_k, proj_v, proj_o,
                        single_buffer_weights=False))

    y_ref = _mqa_reference(x, proj_q, proj_k, proj_v, proj_o)
    assert y.shape == (B, N, dim_in)
    # Tolerance accounts for the online-softmax regrouping and the approximate
    # EUP reciprocal in the finalize step; indexing / head-mapping bugs would
    # produce O(1) errors and still trip this check.
    assert jnp.allclose(y, y_ref, atol=1e-2, rtol=1e-2), \
        f"max abs err {jnp.max(jnp.abs(y - y_ref))}"

    print("KERNEL_OK")
</pallas_src>

<mosaic_0001>
module attributes {stable_mosaic.version = 11 : i64} {
  func.func @_mqa_flash_kernel(%arg0: i32, %arg1: i32, %arg2: i32, %arg3: memref<1x8x8x16xf32, #tpu.memory_space<vmem>>, %arg4: memref<1x8x16xf32, #tpu.memory_space<vmem>>, %arg5: memref<1x8x16xf32, #tpu.memory_space<vmem>>, %arg6: memref<128x32xf32, #tpu.memory_space<vmem>>, %arg7: memref<1x8x32xf32, #tpu.memory_space<vmem>>, %arg8: memref<64x1xf32, #tpu.memory_space<vmem>>, %arg9: memref<64x1xf32, #tpu.memory_space<vmem>>, %arg10: memref<64x16xf32, #tpu.memory_space<vmem>>) attributes {dimension_semantics = [#tpu.dimension_semantics<parallel>, #tpu.dimension_semantics<parallel>, #tpu.dimension_semantics<arbitrary>], iteration_bounds = array<i64: 2, 1, 1>, scalar_prefetch = 0 : i64, scratch_operands = 3 : i64, tpu.core_type = #tpu.core_type<tc>, window_params = [{transform_indices = @transform_0, window_bounds = array<i64: 1, 8, 8, 16>}, {transform_indices = @transform_1, window_bounds = array<i64: 1, 8, 16>}, {transform_indices = @transform_2, window_bounds = array<i64: 1, 8, 16>}, {pipeline_mode = #tpu.pipeline_mode<synchronous>, transform_indices = @transform_3, window_bounds = array<i64: 128, 32>}, {transform_indices = @transform_4, window_bounds = array<i64: 1, 8, 32>}]} {
    %c0_i32 = arith.constant 0 : i32
    %0 = arith.cmpi eq, %arg2, %c0_i32 : i32
    %1 = arith.extui %0 : i1 to i32
    %c0_i32_0 = arith.constant 0 : i32
    %2 = arith.cmpi ne, %1, %c0_i32_0 : i32
    scf.if %2 {
      %cst_27 = arith.constant 0xFF800000 : f32
      %36 = vector.broadcast %cst_27 : f32 to vector<64x1xf32>
      %c0_28 = arith.constant 0 : index
      %c0_29 = arith.constant 0 : index
      %37 = vector.load %arg8[%c0_28, %c0_29] : memref<64x1xf32, #tpu.memory_space<vmem>>, vector<64x1xf32>
      tpu.vector_store %arg8[%c0_28, %c0_29], %36 {strides = array<i32>} : memref<64x1xf32, #tpu.memory_space<vmem>>, vector<64x1xf32>,
      %cst_30 = arith.constant 0.000000e+00 : f32
      %38 = vector.broadcast %cst_30 : f32 to vector<64x1xf32>
      %c0_31 = arith.constant 0 : index
      %c0_32 = arith.constant 0 : index
      %39 = vector.load %arg9[%c0_31, %c0_32] : memref<64x1xf32, #tpu.memory_space<vmem>>, vector<64x1xf32>
      tpu.vector_store %arg9[%c0_31, %c0_32], %38 {strides = array<i32>} : memref<64x1xf32, #tpu.memory_space<vmem>>, vector<64x1xf32>,
      %cst_33 = arith.constant 0.000000e+00 : f32
      %40 = vector.broadcast %cst_33 : f32 to vector<64x16xf32>
      %c0_34 = arith.constant 0 : index
      %c0_35 = arith.constant 0 : index
      %41 = vector.load %arg10[%c0_34, %c0_35] : memref<64x16xf32, #tpu.memory_space<vmem>>, vector<64x16xf32>
      tpu.vector_store %arg10[%c0_34, %c0_35], %40 {strides = array<i32>} : memref<64x16xf32, #tpu.memory_space<vmem>>, vector<64x16xf32>,
    } else {
    }
    %c0 = arith.constant 0 : index
    %c0_1 = arith.constant 0 : index
    %c0_2 = arith.constant 0 : index
    %c0_3 = arith.constant 0 : index
    %3 = vector.load %arg3[%c0, %c0_1, %c0_2, %c0_3] : memref<1x8x8x16xf32, #tpu.memory_space<vmem>>, vector<1x8x8x16xf32>
    %4 = vector.shape_cast %3 : vector<1x8x8x16xf32> to vector<8x8x16xf32>
    %5 = vector.shape_cast %4 : vector<8x8x16xf32> to vector<64x16xf32>
    %c0_4 = arith.constant 0 : index
    %c0_5 = arith.constant 0 : index
    %c0_6 = arith.constant 0 : index
    %6 = vector.load %arg4[%c0_4, %c0_5, %c0_6] : memref<1x8x16xf32, #tpu.memory_space<vmem>>, vector<1x8x16xf32>
    %7 = vector.shape_cast %6 : vector<1x8x16xf32> to vector<8x16xf32>
    %c0_7 = arith.constant 0 : index
    %c0_8 = arith.constant 0 : index
    %c0_9 = arith.constant 0 : index
    %8 = vector.load %arg5[%c0_7, %c0_8, %c0_9] : memref<1x8x16xf32, #tpu.memory_space<vmem>>, vector<1x8x16xf32>
    %9 = vector.shape_cast %8 : vector<1x8x16xf32> to vector<8x16xf32>
    %cst = arith.constant dense<0.000000e+00> : vector<64x8xf32>
    %10 = tpu.matmul %5, %7, %cst {dimension_numbers = #tpu.dot_dimension_numbers<[1], [1], [0], [0], [0, 0, 1, 0], [], []>} : vector<64x16xf32>, vector<8x16xf32>, vector<64x8xf32> -> vector<64x8xf32>
    %c0_10 = arith.constant 0 : index
    %c0_11 = arith.constant 0 : index
    %11 = vector.load %arg8[%c0_10, %c0_11] : memref<64x1xf32, #tpu.memory_space<vmem>>, vector<64x1xf32>
    %cst_12 = arith.constant dense<0xFF800000> : vector<64xf32>
    %12 = vector.multi_reduction <maximumf>, %10, %cst_12 [1] : vector<64x8xf32> to vector<64xf32>
    %13 = vector.shape_cast %12 : vector<64xf32> to vector<64x1xf32>
    %14 = arith.maximumf %11, %13 : vector<64x1xf32>
    %15 = arith.subf %11, %14 : vector<64x1xf32>
    %16 = math.exp %15 : vector<64x1xf32>
    %17 = vector.broadcast %14 : vector<64x1xf32> to vector<64x8xf32>
    %18 = arith.subf %10, %17 : vector<64x8xf32>
    %19 = math.exp %18 : vector<64x8xf32>
    %c0_13 = arith.constant 0 : index
    %c0_14 = arith.constant 0 : index
    %20 = vector.load %arg9[%c0_13, %c0_14] : memref<64x1xf32, #tpu.memory_space<vmem>>, vector<64x1xf32>
    %21 = arith.mulf %16, %20 : vector<64x1xf32>
    %cst_15 = arith.constant dense<0.000000e+00> : vector<64xf32>
    %22 = vector.multi_reduction <add>, %19, %cst_15 [1] : vector<64x8xf32> to vector<64xf32>
    %23 = vector.shape_cast %22 : vector<64xf32> to vector<64x1xf32>
    %24 = arith.addf %21, %23 : vector<64x1xf32>
    %c0_16 = arith.constant 0 : index
    %c0_17 = arith.constant 0 : index
    %25 = vector.load %arg9[%c0_16, %c0_17] : memref<64x1xf32, #tpu.memory_space<vmem>>, vector<64x1xf32>
    tpu.vector_store %arg9[%c0_16, %c0_17], %24 {strides = array<i32>} : memref<64x1xf32, #tpu.memory_space<vmem>>, vector<64x1xf32>,
    %c0_18 = arith.constant 0 : index
    %c0_19 = arith.constant 0 : index
    %26 = vector.load %arg10[%c0_18, %c0_19] : memref<64x16xf32, #tpu.memory_space<vmem>>, vector<64x16xf32>
    %27 = vector.broadcast %16 : vector<64x1xf32> to vector<64x16xf32>
    %28 = arith.mulf %27, %26 : vector<64x16xf32>
    %cst_20 = arith.constant dense<0.000000e+00> : vector<64x16xf32>
    %29 = tpu.matmul %19, %9, %cst_20 {dimension_numbers = #tpu.dot_dimension_numbers<[1], [0], [0], [1], [0, 0, 1, 1], [], []>} : vector<64x8xf32>, vector<8x16xf32>, vector<64x16xf32> -> vector<64x16xf32>
    %30 = arith.addf %28, %29 : vector<64x16xf32>
    %c0_21 = arith.constant 0 : index
    %c0_22 = arith.constant 0 : index
    %31 = vector.load %arg10[%c0_21, %c0_22] : memref<64x16xf32, #tpu.memory_space<vmem>>, vector<64x16xf32>
    tpu.vector_store %arg10[%c0_21, %c0_22], %30 {strides = array<i32>} : memref<64x16xf32, #tpu.memory_space<vmem>>, vector<64x16xf32>,
    %c0_23 = arith.constant 0 : index
    %c0_24 = arith.constant 0 : index
    %32 = vector.load %arg8[%c0_23, %c0_24] : memref<64x1xf32, #tpu.memory_space<vmem>>, vector<64x1xf32>
    tpu.vector_store %arg8[%c0_23, %c0_24], %14 {strides = array<i32>} : memref<64x1xf32, #tpu.memory_space<vmem>>, vector<64x1xf32>,
    %c0_i32_25 = arith.constant 0 : i32
    %33 = arith.cmpi eq, %arg2, %c0_i32_25 : i32
    %34 = arith.extui %33 : i1 to i32
    %c0_i32_26 = arith.constant 0 : i32
    %35 = arith.cmpi ne, %34, %c0_i32_26 : i32
    scf.if %35 {
      %c0_27 = arith.constant 0 : index
      %c0_28 = arith.constant 0 : index
      %36 = vector.load %arg10[%c0_27, %c0_28] : memref<64x16xf32, #tpu.memory_space<vmem>>, vector<64x16xf32>
      %c0_29 = arith.constant 0 : index
      %c0_30 = arith.constant 0 : index
      %37 = vector.load %arg9[%c0_29, %c0_30] : memref<64x1xf32, #tpu.memory_space<vmem>>, vector<64x1xf32>
      %38 = tpu.reciprocal %37 {approx = true} : vector<64x1xf32> -> vector<64x1xf32>
      %39 = vector.broadcast %38 : vector<64x1xf32> to vector<64x16xf32>
      %40 = arith.mulf %36, %39 : vector<64x16xf32>
      %41 = vector.extract_strided_slice %40 {offsets = [0, 0], sizes = [8, 16], strides = [1, 1]} : vector<64x16xf32> to vector<8x16xf32>
      %42 = vector.extract_strided_slice %40 {offsets = [8, 0], sizes = [8, 16], strides = [1, 1]} : vector<64x16xf32> to vector<8x16xf32>
      %43 = vector.extract_strided_slice %40 {offsets = [16, 0], sizes = [8, 16], strides = [1, 1]} : vector<64x16xf32> to vector<8x16xf32>
      %44 = vector.extract_strided_slice %40 {offsets = [24, 0], sizes = [8, 16], strides = [1, 1]} : vector<64x16xf32> to vector<8x16xf32>
      %45 = vector.extract_strided_slice %40 {offsets = [32, 0], sizes = [8, 16], strides = [1, 1]} : vector<64x16xf32> to vector<8x16xf32>
      %46 = vector.extract_strided_slice %40 {offsets = [40, 0], sizes = [8, 16], strides = [1, 1]} : vector<64x16xf32> to vector<8x16xf32>
      %47 = vector.extract_strided_slice %40 {offsets = [48, 0], sizes = [8, 16], strides = [1, 1]} : vector<64x16xf32> to vector<8x16xf32>
      %48 = vector.extract_strided_slice %40 {offsets = [56, 0], sizes = [8, 16], strides = [1, 1]} : vector<64x16xf32> to vector<8x16xf32>
      %49 = tpu.concatenate %41, %42, %43, %44, %45, %46, %47, %48 in 1 : vector<8x16xf32>, vector<8x16xf32>, vector<8x16xf32>, vector<8x16xf32>, vector<8x16xf32>, vector<8x16xf32>, vector<8x16xf32>, vector<8x16xf32> -> vector<8x128xf32>
      %c0_31 = arith.constant 0 : index
      %c0_32 = arith.constant 0 : index
      %50 = vector.load %arg6[%c0_31, %c0_32] : memref<128x32xf32, #tpu.memory_space<vmem>>, vector<128x32xf32>
      %cst_33 = arith.constant dense<0.000000e+00> : vector<8x32xf32>
      %51 = tpu.matmul %49, %50, %cst_33 {dimension_numbers = #tpu.dot_dimension_numbers<[1], [0], [0], [1], [0, 0, 1, 1], [], []>} : vector<8x128xf32>, vector<128x32xf32>, vector<8x32xf32> -> vector<8x32xf32>
      %c0_34 = arith.constant 0 : index
      %c0_35 = arith.constant 0 : index
      %c0_36 = arith.constant 0 : index
      %52 = vector.load %arg7[%c0_34, %c0_35, %c0_36] : memref<1x8x32xf32, #tpu.memory_space<vmem>>, vector<1x8x32xf32>
      %53 = vector.shape_cast %52 : vector<1x8x32xf32> to vector<8x32xf32>
      %54 = vector.shape_cast %51 : vector<8x32xf32> to vector<1x8x32xf32>
      tpu.vector_store %arg7[%c0_34, %c0_35, %c0_36], %54 {strides = array<i32>} : memref<1x8x32xf32, #tpu.memory_space<vmem>>, vector<1x8x32xf32>,
    } else {
    }
    return
  }
  func.func @transform_0(%arg0: i32, %arg1: i32, %arg2: i32) -> (i32, i32, i32, i32) {
    %c0_i32 = arith.constant 0 : i32
    %c0_i32_0 = arith.constant 0 : i32
    %c0_i32_1 = arith.constant 0 : i32
    return %arg0, %c0_i32, %arg1, %c0_i32_0 : i32, i32, i32, i32
  }
  func.func @transform_1(%arg0: i32, %arg1: i32, %arg2: i32) -> (i32, i32, i32) {
    %c0_i32 = arith.constant 0 : i32
    %c0_i32_0 = arith.constant 0 : i32
    return %arg0, %arg2, %c0_i32 : i32, i32, i32
  }
  func.func @transform_2(%arg0: i32, %arg1: i32, %arg2: i32) -> (i32, i32, i32) {
    %c0_i32 = arith.constant 0 : i32
    %c0_i32_0 = arith.constant 0 : i32
    return %arg0, %arg2, %c0_i32 : i32, i32, i32
  }
  func.func @transform_3(%arg0: i32, %arg1: i32, %arg2: i32) -> (i32, i32) {
    %c0_i32 = arith.constant 0 : i32
    %c0_i32_0 = arith.constant 0 : i32
    %c0_i32_1 = arith.constant 0 : i32
    return %c0_i32, %c0_i32_0 : i32, i32
  }
  func.func @transform_4(%arg0: i32, %arg1: i32, %arg2: i32) -> (i32, i32, i32) {
    %c0_i32 = arith.constant 0 : i32
    %c0_i32_0 = arith.constant 0 : i32
    return %arg0, %arg1, %c0_i32 : i32, i32, i32
  }
}

module attributes {stable_mosaic.version = 11 : i64} {
  func.func @_mqa_flash_kernel(%arg0: i32, %arg1: i32, %arg2: i32, %arg3: memref<1x8x8x16xf32, #tpu.memory_space<vmem>>, %arg4: memref<1x8x16xf32, #tpu.memory_space<vmem>>, %arg5: memref<1x8x16xf32, #tpu.memory_space<vmem>>, %arg6: memref<128x32xf32, #tpu.memory_space<vmem>>, %arg7: memref<1x8x32xf32, #tpu.memory_space<vmem>>, %arg8: memref<64x1xf32, #tpu.memory_space<vmem>>, %arg9: memref<64x1xf32, #tpu.memory_space<vmem>>, %arg10: memref<64x16xf32, #tpu.memory_space<vmem>>) attributes {dimension_semantics = [#tpu.dimension_semantics<parallel>, #tpu.dimension_semantics<parallel>, #tpu.dimension_semantics<arbitrary>], iteration_bounds = array<i64: 2, 1, 1>, scalar_prefetch = 0 : i64, scratch_operands = 3 : i64, tpu.core_type = #tpu.core_type<tc>, window_params = [{transform_indices = @transform_0, window_bounds = array<i64: 1, 8, 8, 16>}, {transform_indices = @transform_1, window_bounds = array<i64: 1, 8, 16>}, {transform_indices = @transform_2, window_bounds = array<i64: 1, 8, 16>}, {pipeline_mode = #tpu.pipeline_mode<synchronous>, transform_indices = @transform_3, window_bounds = array<i64: 128, 32>}, {transform_indices = @transform_4, window_bounds = array<i64: 1, 8, 32>}]} {
    %c0_i32 = arith.constant 0 : i32
    %0 = arith.cmpi eq, %arg2, %c0_i32 : i32
    %1 = arith.extui %0 : i1 to i32
    %c0_i32_0 = arith.constant 0 : i32
    %2 = arith.cmpi ne, %1, %c0_i32_0 : i32
    scf.if %2 {
      %cst_27 = arith.constant 0xFF800000 : f32
      %36 = vector.broadcast %cst_27 : f32 to vector<64x1xf32>
      %c0_28 = arith.constant 0 : index
      %c0_29 = arith.constant 0 : index
      %37 = vector.load %arg8[%c0_28, %c0_29] : memref<64x1xf32, #tpu.memory_space<vmem>>, vector<64x1xf32>
      tpu.vector_store %arg8[%c0_28, %c0_29], %36 {strides = array<i32>} : memref<64x1xf32, #tpu.memory_space<vmem>>, vector<64x1xf32>,
      %cst_30 = arith.constant 0.000000e+00 : f32
      %38 = vector.broadcast %cst_30 : f32 to vector<64x1xf32>
      %c0_31 = arith.constant 0 : index
      %c0_32 = arith.constant 0 : index
      %39 = vector.load %arg9[%c0_31, %c0_32] : memref<64x1xf32, #tpu.memory_space<vmem>>, vector<64x1xf32>
      tpu.vector_store %arg9[%c0_31, %c0_32], %38 {strides = array<i32>} : memref<64x1xf32, #tpu.memory_space<vmem>>, vector<64x1xf32>,
      %cst_33 = arith.constant 0.000000e+00 : f32
      %40 = vector.broadcast %cst_33 : f32 to vector<64x16xf32>
      %c0_34 = arith.constant 0 : index
      %c0_35 = arith.constant 0 : index
      %41 = vector.load %arg10[%c0_34, %c0_35] : memref<64x16xf32, #tpu.memory_space<vmem>>, vector<64x16xf32>
      tpu.vector_store %arg10[%c0_34, %c0_35], %40 {strides = array<i32>} : memref<64x16xf32, #tpu.memory_space<vmem>>, vector<64x16xf32>,
    } else {
    }
    %c0 = arith.constant 0 : index
    %c0_1 = arith.constant 0 : index
    %c0_2 = arith.constant 0 : index
    %c0_3 = arith.constant 0 : index
    %3 = vector.load %arg3[%c0, %c0_1, %c0_2, %c0_3] : memref<1x8x8x16xf32, #tpu.memory_space<vmem>>, vector<1x8x8x16xf32>
    %4 = vector.shape_cast %3 : vector<1x8x8x16xf32> to vector<8x8x16xf32>
    %5 = vector.shape_cast %4 : vector<8x8x16xf32> to vector<64x16xf32>
    %c0_4 = arith.constant 0 : index
    %c0_5 = arith.constant 0 : index
    %c0_6 = arith.constant 0 : index
    %6 = vector.load %arg4[%c0_4, %c0_5, %c0_6] : memref<1x8x16xf32, #tpu.memory_space<vmem>>, vector<1x8x16xf32>
    %7 = vector.shape_cast %6 : vector<1x8x16xf32> to vector<8x16xf32>
    %c0_7 = arith.constant 0 : index
    %c0_8 = arith.constant 0 : index
    %c0_9 = arith.constant 0 : index
    %8 = vector.load %arg5[%c0_7, %c0_8, %c0_9] : memref<1x8x16xf32, #tpu.memory_space<vmem>>, vector<1x8x16xf32>
    %9 = vector.shape_cast %8 : vector<1x8x16xf32> to vector<8x16xf32>
    %cst = arith.constant dense<0.000000e+00> : vector<64x8xf32>
    %10 = tpu.matmul %5, %7, %cst {dimension_numbers = #tpu.dot_dimension_numbers<[1], [1], [0], [0], [0, 0, 1, 0], [], []>} : vector<64x16xf32>, vector<8x16xf32>, vector<64x8xf32> -> vector<64x8xf32>
    %c0_10 = arith.constant 0 : index
    %c0_11 = arith.constant 0 : index
    %11 = vector.load %arg8[%c0_10, %c0_11] : memref<64x1xf32, #tpu.memory_space<vmem>>, vector<64x1xf32>
    %cst_12 = arith.constant dense<0xFF800000> : vector<64xf32>
    %12 = vector.multi_reduction <maximumf>, %10, %cst_12 [1] : vector<64x8xf32> to vector<64xf32>
    %13 = vector.shape_cast %12 : vector<64xf32> to vector<64x1xf32>
    %14 = arith.maximumf %11, %13 : vector<64x1xf32>
    %15 = arith.subf %11, %14 : vector<64x1xf32>
    %16 = math.exp %15 : vector<64x1xf32>
    %17 = vector.broadcast %14 : vector<64x1xf32> to vector<64x8xf32>
    %18 = arith.subf %10, %17 : vector<64x8xf32>
    %19 = math.exp %18 : vector<64x8xf32>
    %c0_13 = arith.constant 0 : index
    %c0_14 = arith.constant 0 : index
    %20 = vector.load %arg9[%c0_13, %c0_14] : memref<64x1xf32, #tpu.memory_space<vmem>>, vector<64x1xf32>
    %21 = arith.mulf %16, %20 : vector<64x1xf32>
    %cst_15 = arith.constant dense<0.000000e+00> : vector<64xf32>
    %22 = vector.multi_reduction <add>, %19, %cst_15 [1] : vector<64x8xf32> to vector<64xf32>
    %23 = vector.shape_cast %22 : vector<64xf32> to vector<64x1xf32>
    %24 = arith.addf %21, %23 : vector<64x1xf32>
    %c0_16 = arith.constant 0 : index
    %c0_17 = arith.constant 0 : index
    %25 = vector.load %arg9[%c0_16, %c0_17] : memref<64x1xf32, #tpu.memory_space<vmem>>, vector<64x1xf32>
    tpu.vector_store %arg9[%c0_16, %c0_17], %24 {strides = array<i32>} : memref<64x1xf32, #tpu.memory_space<vmem>>, vector<64x1xf32>,
    %c0_18 = arith.constant 0 : index
    %c0_19 = arith.constant 0 : index
    %26 = vector.load %arg10[%c0_18, %c0_19] : memref<64x16xf32, #tpu.memory_space<vmem>>, vector<64x16xf32>
    %27 = vector.broadcast %16 : vector<64x1xf32> to vector<64x16xf32>
    %28 = arith.mulf %27, %26 : vector<64x16xf32>
    %cst_20 = arith.constant dense<0.000000e+00> : vector<64x16xf32>
    %29 = tpu.matmul %19, %9, %cst_20 {dimension_numbers = #tpu.dot_dimension_numbers<[1], [0], [0], [1], [0, 0, 1, 1], [], []>} : vector<64x8xf32>, vector<8x16xf32>, vector<64x16xf32> -> vector<64x16xf32>
    %30 = arith.addf %28, %29 : vector<64x16xf32>
    %c0_21 = arith.constant 0 : index
    %c0_22 = arith.constant 0 : index
    %31 = vector.load %arg10[%c0_21, %c0_22] : memref<64x16xf32, #tpu.memory_space<vmem>>, vector<64x16xf32>
    tpu.vector_store %arg10[%c0_21, %c0_22], %30 {strides = array<i32>} : memref<64x16xf32, #tpu.memory_space<vmem>>, vector<64x16xf32>,
    %c0_23 = arith.constant 0 : index
    %c0_24 = arith.constant 0 : index
    %32 = vector.load %arg8[%c0_23, %c0_24] : memref<64x1xf32, #tpu.memory_space<vmem>>, vector<64x1xf32>
    tpu.vector_store %arg8[%c0_23, %c0_24], %14 {strides = array<i32>} : memref<64x1xf32, #tpu.memory_space<vmem>>, vector<64x1xf32>,
    %c0_i32_25 = arith.constant 0 : i32
    %33 = arith.cmpi eq, %arg2, %c0_i32_25 : i32
    %34 = arith.extui %33 : i1 to i32
    %c0_i32_26 = arith.constant 0 : i32
    %35 = arith.cmpi ne, %34, %c0_i32_26 : i32
    scf.if %35 {
      %c0_27 = arith.constant 0 : index
      %c0_28 = arith.constant 0 : index
      %36 = vector.load %arg10[%c0_27, %c0_28] : memref<64x16xf32, #tpu.memory_space<vmem>>, vector<64x16xf32>
      %c0_29 = arith.constant 0 : index
      %c0_30 = arith.constant 0 : index
      %37 = vector.load %arg9[%c0_29, %c0_30] : memref<64x1xf32, #tpu.memory_space<vmem>>, vector<64x1xf32>
      %38 = tpu.reciprocal %37 {approx = true} : vector<64x1xf32> -> vector<64x1xf32>
      %39 = vector.broadcast %38 : vector<64x1xf32> to vector<64x16xf32>
      %40 = arith.mulf %36, %39 : vector<64x16xf32>
      %41 = vector.extract_strided_slice %40 {offsets = [0, 0], sizes = [8, 16], strides = [1, 1]} : vector<64x16xf32> to vector<8x16xf32>
      %42 = vector.extract_strided_slice %40 {offsets = [8, 0], sizes = [8, 16], strides = [1, 1]} : vector<64x16xf32> to vector<8x16xf32>
      %43 = vector.extract_strided_slice %40 {offsets = [16, 0], sizes = [8, 16], strides = [1, 1]} : vector<64x16xf32> to vector<8x16xf32>
      %44 = vector.extract_strided_slice %40 {offsets = [24, 0], sizes = [8, 16], strides = [1, 1]} : vector<64x16xf32> to vector<8x16xf32>
      %45 = vector.extract_strided_slice %40 {offsets = [32, 0], sizes = [8, 16], strides = [1, 1]} : vector<64x16xf32> to vector<8x16xf32>
      %46 = vector.extract_strided_slice %40 {offsets = [40, 0], sizes = [8, 16], strides = [1, 1]} : vector<64x16xf32> to vector<8x16xf32>
      %47 = vector.extract_strided_slice %40 {offsets = [48, 0], sizes = [8, 16], strides = [1, 1]} : vector<64x16xf32> to vector<8x16xf32>
      %48 = vector.extract_strided_slice %40 {offsets = [56, 0], sizes = [8, 16], strides = [1, 1]} : vector<64x16xf32> to vector<8x16xf32>
      %49 = tpu.concatenate %41, %42, %43, %44, %45, %46, %47, %48 in 1 : vector<8x16xf32>, vector<8x16xf32>, vector<8x16xf32>, vector<8x16xf32>, vector<8x16xf32>, vector<8x16xf32>, vector<8x16xf32>, vector<8x16xf32> -> vector<8x128xf32>
      %c0_31 = arith.constant 0 : index
      %c0_32 = arith.constant 0 : index
      %50 = vector.load %arg6[%c0_31, %c0_32] : memref<128x32xf32, #tpu.memory_space<vmem>>, vector<128x32xf32>
      %cst_33 = arith.constant dense<0.000000e+00> : vector<8x32xf32>
      %51 = tpu.matmul %49, %50, %cst_33 {dimension_numbers = #tpu.dot_dimension_numbers<[1], [0], [0], [1], [0, 0, 1, 1], [], []>} : vector<8x128xf32>, vector<128x32xf32>, vector<8x32xf32> -> vector<8x32xf32>
      %c0_34 = arith.constant 0 : index
      %c0_35 = arith.constant 0 : index
      %c0_36 = arith.constant 0 : index
      %52 = vector.load %arg7[%c0_34, %c0_35, %c0_36] : memref<1x8x32xf32, #tpu.memory_space<vmem>>, vector<1x8x32xf32>
      %53 = vector.shape_cast %52 : vector<1x8x32xf32> to vector<8x32xf32>
      %54 = vector.shape_cast %51 : vector<8x32xf32> to vector<1x8x32xf32>
      tpu.vector_store %arg7[%c0_34, %c0_35, %c0_36], %54 {strides = array<i32>} : memref<1x8x32xf32, #tpu.memory_space<vmem>>, vector<1x8x32xf32>,
    } else {
    }
    return
  }
  func.func @transform_0(%arg0: i32, %arg1: i32, %arg2: i32) -> (i32, i32, i32, i32) {
    %c0_i32 = arith.constant 0 : i32
    %c0_i32_0 = arith.constant 0 : i32
    %c0_i32_1 = arith.constant 0 : i32
    return %arg0, %c0_i32, %arg1, %c0_i32_0 : i32, i32, i32, i32
  }
  func.func @transform_1(%arg0: i32, %arg1: i32, %arg2: i32) -> (i32, i32, i32) {
    %c0_i32 = arith.constant 0 : i32
    %c0_i32_0 = arith.constant 0 : i32
    return %arg0, %arg2, %c0_i32 : i32, i32, i32
  }
  func.func @transform_2(%arg0: i32, %arg1: i32, %arg2: i32) -> (i32, i32, i32) {
    %c0_i32 = arith.constant 0 : i32
    %c0_i32_0 = arith.constant 0 : i32
    return %arg0, %arg2, %c0_i32 : i32, i32, i32
  }
  func.func @transform_3(%arg0: i32, %arg1: i32, %arg2: i32) -> (i32, i32) {
    %c0_i32 = arith.constant 0 : i32
    %c0_i32_0 = arith.constant 0 : i32
    %c0_i32_1 = arith.constant 0 : i32
    return %c0_i32, %c0_i32_0 : i32, i32
  }
  func.func @transform_4(%arg0: i32, %arg1: i32, %arg2: i32) -> (i32, i32, i32) {
    %c0_i32 = arith.constant 0 : i32
    %c0_i32_0 = arith.constant 0 : i32
    return %arg0, %arg1, %c0_i32 : i32, i32, i32
  }
}

</mosaic_0001>

<llo_original>
// kernel: tpu_custom_call.1
$region0: #{tpu_custom_call.1}
  #allocation0 [shape = 'u32[]', space=smem, size = 0x4, offset = 0x4, fixed_abs, tag = 'smem constant byte address 0x4 - core index']
  #allocation1 [shape = 'u32[72,128]{1,0:T(1,128)}', space=vmem, size = 0x9000, scoped, tag = 'internal scratch']
  #allocation2 [shape = 'f32[64,1]{1,0:T(8,128)}', space=vmem, size = 0x8000, scoped, tag = 'scratch operand']
  #allocation3 [shape = 'f32[64,1]{1,0:T(8,128)}', space=vmem, size = 0x8000, scoped, tag = 'scratch operand']
  #allocation4 [shape = 'f32[64,16]{1,0:T(8,128)}', space=vmem, size = 0x8000, scoped, tag = 'scratch operand']
  %s0 = inlined_call_operand.vmem [shape: f32[2,8,8,16], index: 0, kind: input, shape index: {}]
  %s1 = inlined_call_operand.vmem [shape: f32[2,8,16], index: 1, kind: input, shape index: {}]
  %s2 = inlined_call_operand.vmem [shape: f32[2,8,16], index: 2, kind: input, shape index: {}]
  %s3 = inlined_call_operand.vmem [shape: f32[128,32], index: 3, kind: input, shape index: {}]
  %s4 = inlined_call_operand.hbm [shape: f32[2,8,32], index: 4, kind: output, shape index: {}]
  %s5 = sld [smem:[#allocation0]]
  $region57: #{tpu_custom_call.1} parent=0
    _
  %s7 = ssub.s32 1, %s5
  %s8 = scalar_select 0, %s7, %s5
  $region1: #{tpu_custom_call.1} parent=0
    #allocation5 [shape = 'u8[8192]{0}', space=vmem, size = 0x2000, scoped, tag = 'output window, operand 0']
    #allocation6 [shape = 's32[2]{0}', space=sflag, size = 0x8, scoped, tag = 'scoped memory for tpu_custom_call.1']
    %9 = vsyncpa [#allocation6], 0
    %s10 = scalar_lea.sflag [#allocation6], 1
    %11 = vsyncpa %s10, 0
    loop: start=0, step=1, limit=4
    $region2: #{tpu_custom_call.1} parent=1 // loop_pre_header
      _
    $region3: #{tpu_custom_call.1} parent=1 // loop_header
      %s13 = sphi 0, %s17
      %p14 = scmp.ge.s32.totalorder %s13, 4
      %s20 = sphi 0, %s39
      %s21 = sphi 0, %s35
      %s22 = sphi 0, %s31
      %s23 = sphi 0, %s20
      %s24 = sphi 0, %s21
      %s25 = sphi 0, %s22
      %s26 = sphi 0, %s23
      %s27 = sphi 0, %s24
      %s28 = sphi 0, %s25
      %s44 = sphi 0, %s46
      %s47 = sphi 0, %s44
      %s48 = sphi 0, %s47
      %s64 = sphi 0, %s48
      %s72 = sphi 0, %s74
      %s75 = sphi 0, %s72
      %s76 = sphi 0, %s75
      %s92 = sphi 0, %s76
      %s100 = sphi 0, %s102
      %s103 = sphi 0, %s100
      %s104 = sphi 0, %s103
      %s120 = sphi 0, %s104
      %s124 = sphi 0, %s124
      %s126 = sphi 0, %s124
      %s127 = sphi 0, %s126
      %s141 = sphi 0, %s127
      %s149 = sphi 0, %s151
      %s152 = sphi 0, %s149
      %s153 = sphi 0, %s152
      %s169 = sphi 0, %s153
    $region4: #{tpu_custom_call.1} parent=1 // loop_header_branch
      %16 = sbr.rel (%p14) target = $region8
    $region5: #{tpu_custom_call.1} parent=1 // loop_body
      %s18 = ssub.s32 %s13, 1
      %s19 = ssub.s32 %s13, 2
      %s29 = sadd.s32 1, %s22
      %p30 = scmp.ge.s32.totalorder %s29, 1
      %s31 = scalar_select %p30, 0, %s29
      %s32 = sadd.s32 1, %s21
      %s33 = scalar_select %p30, %s32, %s21
      %p34 = scmp.ge.s32.totalorder %s33, 1
      %s35 = scalar_select %p34, 0, %s33
      %s36 = sadd.s32 1, %s20
      %s37 = scalar_select %p34, %s36, %s20
      %p38 = scmp.ge.s32.totalorder %s37, 2
      %s39 = scalar_select %p38, 0, %s37
      %s40 = ssub.s32 %s20, %s39
      %s41 = ssub.s32 %s21, %s35
      %s42 = sor.u32 %s40, %s41
      %p43 = scmp.eq.s32.totalorder %s42, 0
      %s45 = sadd.s32 %s44, 1
      %s46 = scalar_select %p43, %s44, %s45
      %p49 = pneg %p43
      %p50 = scmp.eq.s32.totalorder %s13, 1
      %p51 = por %p49, %p50
      %p52 = scmp.ne.s32.totalorder %s44, %s47
      %p53 = scmp.eq.s32.totalorder %s13, 0
      %p54 = por %p52, %p53
      %p55 = scmp.ne.s32.totalorder %s44, %s47
      %p56 = scmp.eq.s32.totalorder %s18, 1
      %p57 = por %p55, %p56
      %p58 = scmp.ne.s32.totalorder %s47, %s48
      %p59 = scmp.eq.s32.totalorder %s18, 0
      %p60 = por %p58, %p59
      %p61 = scmp.ne.s32.totalorder %s47, %s48
      %p62 = scmp.eq.s32.totalorder %s19, 1
      %p63 = por %p61, %p62
      %p65 = scmp.ne.s32.totalorder %s48, %s64
      %p66 = scmp.eq.s32.totalorder %s19, 0
      %p67 = por %p65, %p66
      %s68 = ssub.s32 %s20, %s39
      %s69 = ssub.s32 %s22, %s31
      %s70 = sor.u32 %s68, %s69
      %p71 = scmp.eq.s32.totalorder %s70, 0
      %s73 = sadd.s32 %s72, 1
      %s74 = scalar_select %p71, %s72, %s73
      %p77 = pneg %p71
      %p78 = scmp.eq.s32.totalorder %s13, 1
      %p79 = por %p77, %p78
      %p80 = scmp.ne.s32.totalorder %s72, %s75
      %p81 = scmp.eq.s32.totalorder %s13, 0
      %p82 = por %p80, %p81
      %p83 = scmp.ne.s32.totalorder %s72, %s75
      %p84 = scmp.eq.s32.totalorder %s18, 1
      %p85 = por %p83, %p84
      %p86 = scmp.ne.s32.totalorder %s75, %s76
      %p87 = scmp.eq.s32.totalorder %s18, 0
      %p88 = por %p86, %p87
      %p89 = scmp.ne.s32.totalorder %s75, %s76
      %p90 = scmp.eq.s32.totalorder %s19, 1
      %p91 = por %p89, %p90
      %p93 = scmp.ne.s32.totalorder %s76, %s92
      %p94 = scmp.eq.s32.totalorder %s19, 0
      %p95 = por %p93, %p94
      %s96 = ssub.s32 %s20, %s39
      %s97 = ssub.s32 %s22, %s31
      %s98 = sor.u32 %s96, %s97
      %p99 = scmp.eq.s32.totalorder %s98, 0
      %s101 = sadd.s32 %s100, 1
      %s102 = scalar_select %p99, %s100, %s101
      %p105 = pneg %p99
      %p106 = scmp.eq.s32.totalorder %s13, 1
      %p107 = por %p105, %p106
      %p108 = scmp.ne.s32.totalorder %s100, %s103
      %p109 = scmp.eq.s32.totalorder %s13, 0
      %p110 = por %p108, %p109
      %p111 = scmp.ne.s32.totalorder %s100, %s103
      %p112 = scmp.eq.s32.totalorder %s18, 1
      %p113 = por %p111, %p112
      %p114 = scmp.ne.s32.totalorder %s103, %s104
      %p115 = scmp.eq.s32.totalorder %s18, 0
      %p116 = por %p114, %p115
      %p117 = scmp.ne.s32.totalorder %s103, %s104
      %p118 = scmp.eq.s32.totalorder %s19, 1
      %p119 = por %p117, %p118
      %p121 = scmp.ne.s32.totalorder %s104, %s120
      %p122 = scmp.eq.s32.totalorder %s19, 0
      %p123 = por %p121, %p122
      %s125 = sadd.s32 %s124, 1
      %p128 = scmp.eq.s32.totalorder %s13, 1
      %p129 = scmp.ne.s32.totalorder %s124, %s126
      %p130 = scmp.eq.s32.totalorder %s13, 0
      %p131 = por %p129, %p130
      %p132 = scmp.ne.s32.totalorder %s124, %s126
      %p133 = scmp.eq.s32.totalorder %s18, 1
      %p134 = por %p132, %p133
      %p135 = scmp.ne.s32.totalorder %s126, %s127
      %p136 = scmp.eq.s32.totalorder %s18, 0
      %p137 = por %p135, %p136
      %p138 = scmp.ne.s32.totalorder %s126, %s127
      %p139 = scmp.eq.s32.totalorder %s19, 1
      %p140 = por %p138, %p139
      %p142 = scmp.ne.s32.totalorder %s127, %s141
      %p143 = scmp.eq.s32.totalorder %s19, 0
      %p144 = por %p142, %p143
      %s145 = ssub.s32 %s20, %s39
      %s146 = ssub.s32 %s21, %s35
      %s147 = sor.u32 %s145, %s146
      %p148 = scmp.eq.s32.totalorder %s147, 0
      %s150 = sadd.s32 %s149, 1
      %s151 = scalar_select %p148, %s149, %s150
      %p154 = pneg %p148
      %p155 = scmp.eq.s32.totalorder %s13, 1
      %p156 = por %p154, %p155
      %p157 = scmp.ne.s32.totalorder %s149, %s152
      %p158 = scmp.eq.s32.totalorder %s13, 0
      %p159 = por %p157, %p158
      %p160 = scmp.ne.s32.totalorder %s149, %s152
      %p161 = scmp.eq.s32.totalorder %s18, 1
      %p162 = por %p160, %p161
      %p163 = scmp.ne.s32.totalorder %s152, %s153
      %p164 = scmp.eq.s32.totalorder %s18, 0
      %p165 = por %p163, %p164
      %p166 = scmp.ne.s32.totalorder %s152, %s153
      %p167 = scmp.eq.s32.totalorder %s19, 1
      %p168 = por %p166, %p167
      %p170 = scmp.ne.s32.totalorder %s153, %s169
      %p171 = scmp.eq.s32.totalorder %s19, 0
      %p172 = por %p170, %p171
      %p173 = scmp.le.s32.totalorder 1, %s13
      %p174 = scmp.lt.s32.totalorder %s13, 3
      %p175 = pnand %p173, %p174
      %p176 = pneg %p175
      // Predicated region
      $region9: #{tpu_custom_call.1} parent=5 // pred_check
        _
      $region10: #{tpu_custom_call.1} parent=5 // pred_check_branch
        %178 = sbr.rel (%p175) target = $region12
      $region11: #{tpu_custom_call.1} parent=5 // pred_region
        %s179 = ssub.s32 %s13, 1
        // Predicated region
        $region13: #{tpu_custom_call.1} parent=11 // pred_check
          %p180 = pneg %p137
        $region14: #{tpu_custom_call.1} parent=11 // pred_check_branch
          %182 = sbr.rel (%p180) target = $region16
        $region15: #{tpu_custom_call.1} parent=11 // pred_region
          _
        $region16: #{tpu_custom_call.1} parent=11 // pred_fallthru
          _
      $region12: #{tpu_custom_call.1} parent=5 // pred_fallthru
        _
      %p183 = scmp.lt.s32.totalorder %s13, 2
      // Predicated region
      $region17: #{tpu_custom_call.1} parent=5 // pred_check
        %p184 = pneg %p183
      $region18: #{tpu_custom_call.1} parent=5 // pred_check_branch
        %186 = sbr.rel (%p184) target = $region20
      $region19: #{tpu_custom_call.1} parent=5 // pred_region
        // Predicated region
        $region21: #{tpu_custom_call.1} parent=19 // pred_check
          %p187 = pneg %p54
        $region22: #{tpu_custom_call.1} parent=19 // pred_check_branch
          %189 = sbr.rel (%p187) target = $region24
        $region23: #{tpu_custom_call.1} parent=19 // pred_region
          %p190 = scmp.lt.s32.totalorder %s20, 1
          %s191 = scalar_select %p190, %s20, 1
          %p192 = scmp.lt.s32.totalorder %s21, 0
          %s193 = scalar_select %p192, %s21, 0
          %s194 = smul.addr %s191, 8
          %s195 = sadd.s32 %s193, %s194
          %s196 = smul.addr %s195, 8
          %s197 = scalar_lea.vmem %s0, %s196
        $region24: #{tpu_custom_call.1} parent=19 // pred_fallthru
          _
        // Predicated region
        $region25: #{tpu_custom_call.1} parent=19 // pred_check
          %p198 = pneg %p82
        $region26: #{tpu_custom_call.1} parent=19 // pred_check_branch
          %200 = sbr.rel (%p198) target = $region28
        $region27: #{tpu_custom_call.1} parent=19 // pred_region
          %p201 = scmp.lt.s32.totalorder %s20, 1
          %s202 = scalar_select %p201, %s20, 1
          %p203 = scmp.lt.s32.totalorder %s22, 0
          %s204 = scalar_select %p203, %s22, 0
          %s205 = sadd.s32 %s204, %s202
          %s206 = smul.addr %s205, 8
          %s207 = scalar_lea.vmem %s1, %s206
        $region28: #{tpu_custom_call.1} parent=19 // pred_fallthru
          _
        // Predicated region
        $region29: #{tpu_custom_call.1} parent=19 // pred_check
          %p208 = pneg %p110
        $region30: #{tpu_custom_call.1} parent=19 // pred_check_branch
          %210 = sbr.rel (%p208) target = $region32
        $region31: #{tpu_custom_call.1} parent=19 // pred_region
          %p211 = scmp.lt.s32.totalorder %s20, 1
          %s212 = scalar_select %p211, %s20, 1
          %p213 = scmp.lt.s32.totalorder %s22, 0
          %s214 = scalar_select %p213, %s22, 0
          %s215 = sadd.s32 %s214, %s212
          %s216 = smul.addr %s215, 8
          %s217 = scalar_lea.vmem %s2, %s216
        $region32: #{tpu_custom_call.1} parent=19 // pred_fallthru
          _
      $region20: #{tpu_custom_call.1} parent=5 // pred_fallthru
        _
      %p218 = scmp.le.s32.totalorder 1, %s13
      %p219 = scmp.lt.s32.totalorder %s13, 3
      %p220 = pnand %p218, %p219
      %p221 = pneg %p220
      // Predicated region
      $region33: #{tpu_custom_call.1} parent=5 // pred_check
        _
      $region34: #{tpu_custom_call.1} parent=5 // pred_check_branch
        %223 = sbr.rel (%p220) target = $region36
      $region35: #{tpu_custom_call.1} parent=5 // pred_region
        %s224 = ssub.s32 %s13, 1
        %p225 = scmp.lt.s32.totalorder %s23, 1
        %s226 = scalar_select %p225, %s23, 1
        %p227 = scmp.lt.s32.totalorder %s24, 0
        %s228 = scalar_select %p227, %s24, 0
        %s229 = smul.addr %s226, 8
        %s230 = sadd.s32 %s228, %s229
        %s231 = smul.addr %s230, 8
        %s232 = scalar_lea.vmem %s0, %s231
        %p233 = pneg %p60
        %p234 = pneg %p57
        %p235 = scmp.lt.s32.totalorder %s23, 1
        %s236 = scalar_select %p235, %s23, 1
        %p237 = scmp.lt.s32.totalorder %s25, 0
        %s238 = scalar_select %p237, %s25, 0
        %s239 = sadd.s32 %s238, %s236
        %s240 = smul.addr %s239, 8
        %s241 = scalar_lea.vmem %s1, %s240
        %p242 = pneg %p88
        %p243 = pneg %p85
        %p244 = scmp.lt.s32.totalorder %s23, 1
        %s245 = scalar_select %p244, %s23, 1
        %p246 = scmp.lt.s32.totalorder %s25, 0
        %s247 = scalar_select %p246, %s25, 0
        %s248 = sadd.s32 %s247, %s245
        %s249 = smul.addr %s248, 8
        %s250 = scalar_lea.vmem %s2, %s249
        %p251 = pneg %p116
        %p252 = pneg %p113
        %p253 = pneg %p137
        %p254 = pneg %p134
        %p255 = pneg %p165
        %p256 = pneg %p162
        %s257 = sand.u32 %s152, 1
        %s258 = scalar_lea.sflag [#allocation6], %s257
        %s259 = sand.u32 %s152, 1
        %s260 = smul.addr %s259, 8
        %s261 = scalar_lea.vmem [#allocation5], %s260
        %p262 = scmp.lt.s32.totalorder %s23, 1
        %s263 = scalar_select %p262, %s23, 1
        %p264 = scmp.lt.s32.totalorder %s24, 0
        %s265 = scalar_select %p264, %s24, 0
        %s266 = smul.addr %s263, 8
        %s267 = sadd.s32 %s265, %s266
        %s268 = smul.addr %s267, 8
        %s269 = scalar_lea.vmem %s0, %s268
        %p270 = scmp.lt.s32.totalorder %s23, 1
        %s271 = scalar_select %p270, %s23, 1
        %p272 = scmp.lt.s32.totalorder %s25, 0
        %s273 = scalar_select %p272, %s25, 0
        %s274 = sadd.s32 %s273, %s271
        %s275 = smul.addr %s274, 8
        %s276 = scalar_lea.vmem %s1, %s275
        %p277 = scmp.lt.s32.totalorder %s23, 1
        %s278 = scalar_select %p277, %s23, 1
        %p279 = scmp.lt.s32.totalorder %s25, 0
        %s280 = scalar_select %p279, %s25, 0
        %s281 = sadd.s32 %s280, %s278
        %s282 = smul.addr %s281, 8
        %s283 = scalar_lea.vmem %s2, %s282
        %p284 = scmp.eq.s32.totalorder %s25, 0
        // Predicated region
        $region37: #{tpu_custom_call.1} parent=35 // pred_check
          %p285 = pneg %p284
        $region38: #{tpu_custom_call.1} parent=35 // pred_check_branch
          %287 = sbr.rel (%p285) target = $region40
        $region39: #{tpu_custom_call.1} parent=35 // pred_region
          %vm288 = vcmask 7168
          %289 = vst.msk [vmem:[#allocation2] sm:$0xff] %vm288, -inf
          %290 = vst.msk [vmem:[#allocation2 + $0x8] sm:$0xff] %vm288, -inf
          %291 = vst.msk [vmem:[#allocation2 + $0x10] sm:$0xff] %vm288, -inf
          %292 = vst.msk [vmem:[#allocation2 + $0x18] sm:$0xff] %vm288, -inf
          %293 = vst.msk [vmem:[#allocation2 + $0x20] sm:$0xff] %vm288, -inf
          %294 = vst.msk [vmem:[#allocation2 + $0x28] sm:$0xff] %vm288, -inf
          %295 = vst.msk [vmem:[#allocation2 + $0x30] sm:$0xff] %vm288, -inf
          %296 = vst.msk [vmem:[#allocation2 + $0x38] sm:$0xff] %vm288, -inf
          %297 = vst.msk [vmem:[#allocation3] sm:$0xff] %vm288, 0.0
          %298 = vst.msk [vmem:[#allocation3 + $0x8] sm:$0xff] %vm288, 0.0
          %299 = vst.msk [vmem:[#allocation3 + $0x10] sm:$0xff] %vm288, 0.0
          %300 = vst.msk [vmem:[#allocation3 + $0x18] sm:$0xff] %vm288, 0.0
          %301 = vst.msk [vmem:[#allocation3 + $0x20] sm:$0xff] %vm288, 0.0
          %302 = vst.msk [vmem:[#allocation3 + $0x28] sm:$0xff] %vm288, 0.0
          %303 = vst.msk [vmem:[#allocation3 + $0x30] sm:$0xff] %vm288, 0.0
          %304 = vst.msk [vmem:[#allocation3 + $0x38] sm:$0xff] %vm288, 0.0
          %vm305 = vcmask 130048
          %306 = vst.msk [vmem:[#allocation4] sm:$0xff] %vm305, 0.0
          %307 = vst.msk [vmem:[#allocation4 + $0x8] sm:$0xff] %vm305, 0.0
          %308 = vst.msk [vmem:[#allocation4 + $0x10] sm:$0xff] %vm305, 0.0
          %309 = vst.msk [vmem:[#allocation4 + $0x18] sm:$0xff] %vm305, 0.0
          %310 = vst.msk [vmem:[#allocation4 + $0x20] sm:$0xff] %vm305, 0.0
          %311 = vst.msk [vmem:[#allocation4 + $0x28] sm:$0xff] %vm305, 0.0
          %312 = vst.msk [vmem:[#allocation4 + $0x30] sm:$0xff] %vm305, 0.0
          %313 = vst.msk [vmem:[#allocation4 + $0x38] sm:$0xff] %vm305, 0.0
        $region40: #{tpu_custom_call.1} parent=35 // pred_fallthru
          _
        %v314 = vld [vmem:[%s269] sm:$0xff]
        %v315 = vld [vmem:[%s269 + $0x8] sm:$0xff]
        %v316 = vld [vmem:[%s269 + $0x10] sm:$0xff]
        %v317 = vld [vmem:[%s269 + $0x18] sm:$0xff]
        %v318 = vld [vmem:[%s269 + $0x20] sm:$0xff]
        %v319 = vld [vmem:[%s269 + $0x28] sm:$0xff]
        %v320 = vld [vmem:[%s269 + $0x30] sm:$0xff]
        %v321 = vld [vmem:[%s269 + $0x38] sm:$0xff]
        %v322 = vld [vmem:[%s276] sm:$0xff]
        %v323 = vld [vmem:[%s283] sm:$0xff]
        %vm324 = vcmask 130048
        %v326 = vsel %vm324, %v314, 0
        %v329 = vsel %vm324, %v315, 0
        %v332 = vsel %vm324, %v316, 0
        %v335 = vsel %vm324, %v317, 0
        %v338 = vsel %vm324, %v318, 0
        %v341 = vsel %vm324, %v319, 0
        %v344 = vsel %vm324, %v320, 0
        %v347 = vsel %vm324, %v321, 0
        %v350 = vsel %vm324, %v322, 0
        %352 = vmatpush.xpose.msra.mxu0 0.0
        %353 = vmatpush.xpose.msra.mxu0 0.0
        %354 = vmatpush.xpose.msra.mxu0 0.0
        %355 = vmatpush.xpose.msra.mxu0 0.0
        %356 = vmatpush.xpose.msra.mxu0 0.0
        %357 = vmatpush.xpose.msra.mxu0 0.0
        %358 = vmatpush.xpose.msra.mxu0 0.0
        %359 = vmatpush.xpose.msra.mxu0 0.0
        %360 = vmatpush.xpose.msra.mxu0 0.0
        %361 = vmatpush.xpose.msra.mxu0 0.0
        %362 = vmatpush.xpose.msra.mxu0 0.0
        %363 = vmatpush.xpose.msra.mxu0 0.0
        %364 = vmatpush.xpose.msra.mxu0 0.0
        %365 = vmatpush.xpose.msra.mxu0 0.0
        %366 = vmatpush.xpose.msra.mxu0 0.0
        %367 = vmatpush.xpose.msra.mxu0 %v350
        %368 = vmatmul.f32.gmra.mxu0 %v326
        %v369 = vpop.f32.mrf.mxu0
        %v370 = vadd.f32 0.0, %v369
        %371 = vmatmul.f32.gmra.mxu0 %v329
        %v372 = vpop.f32.mrf.mxu0
        %v373 = vadd.f32 0.0, %v372
        %374 = vmatmul.f32.gmra.mxu0 %v332
        %v375 = vpop.f32.mrf.mxu0
        %v376 = vadd.f32 0.0, %v375
        %377 = vmatmul.f32.gmra.mxu0 %v335
        %v378 = vpop.f32.mrf.mxu0
        %v379 = vadd.f32 0.0, %v378
        %380 = vmatmul.f32.gmra.mxu0 %v338
        %v381 = vpop.f32.mrf.mxu0
        %v382 = vadd.f32 0.0, %v381
        %383 = vmatmul.f32.gmra.mxu0 %v341
        %v384 = vpop.f32.mrf.mxu0
        %v385 = vadd.f32 0.0, %v384
        %386 = vmatmul.f32.gmra.mxu0 %v344
        %v387 = vpop.f32.mrf.mxu0
        %v388 = vadd.f32 0.0, %v387
        %389 = vmatmul.f32.gmra.mxu0 %v347
        %v390 = vpop.f32.mrf.mxu0
        %v391 = vadd.f32 0.0, %v390
        %392 = vdwg.mxu0
        %v393 = vld [vmem:[#allocation2] sm:$0xff]
        %v394 = vld [vmem:[#allocation2 + $0x8] sm:$0xff]
        %v395 = vld [vmem:[#allocation2 + $0x10] sm:$0xff]
        %v396 = vld [vmem:[#allocation2 + $0x18] sm:$0xff]
        %v397 = vld [vmem:[#allocation2 + $0x20] sm:$0xff]
        %v398 = vld [vmem:[#allocation2 + $0x28] sm:$0xff]
        %v399 = vld [vmem:[#allocation2 + $0x30] sm:$0xff]
        %v400 = vld [vmem:[#allocation2 + $0x38] sm:$0xff]
        %vm401 = vcmask 64512
        %v402 = vsel %vm401, %v370, -inf
        %403 = vmax.xlane.f32.xlu0 %v402
        %v404 = vpop.xlane.xlu0 %403
        %v405 = vsel %vm401, %v373, -inf
        %406 = vmax.xlane.f32.xlu0 %v405
        %v407 = vpop.xlane.xlu0 %406
        %v408 = vsel %vm401, %v376, -inf
        %409 = vmax.xlane.f32.xlu0 %v408
        %v410 = vpop.xlane.xlu0 %409
        %v411 = vsel %vm401, %v379, -inf
        %412 = vmax.xlane.f32.xlu0 %v411
        %v413 = vpop.xlane.xlu0 %412
        %v414 = vsel %vm401, %v382, -inf
        %415 = vmax.xlane.f32.xlu0 %v414
        %v416 = vpop.xlane.xlu0 %415
        %v417 = vsel %vm401, %v385, -inf
        %418 = vmax.xlane.f32.xlu0 %v417
        %v419 = vpop.xlane.xlu0 %418
        %v420 = vsel %vm401, %v388, -inf
        %421 = vmax.xlane.f32.xlu0 %v420
        %v422 = vpop.xlane.xlu0 %421
        %v423 = vsel %vm401, %v391, -inf
        %424 = vmax.xlane.f32.xlu0 %v423
        %v425 = vpop.xlane.xlu0 %424
        %v426 = vmax.f32 %v393, %v404
        %v427 = vmax.f32 %v394, %v407
        %v428 = vmax.f32 %v395, %v410
        %v429 = vmax.f32 %v396, %v413
        %v430 = vmax.f32 %v397, %v416
        %v431 = vmax.f32 %v398, %v419
        %v432 = vmax.f32 %v399, %v422
        %v433 = vmax.f32 %v400, %v425
        %v434 = vsub.f32 %v393, %v426
        %v435 = vsub.f32 %v394, %v427
        %v436 = vsub.f32 %v395, %v428
        %v437 = vsub.f32 %v396, %v429
        %v438 = vsub.f32 %v397, %v430
        %v439 = vsub.f32 %v398, %v431
        %v440 = vsub.f32 %v399, %v432
        %v441 = vsub.f32 %v400, %v433
        %v442 = vmul.f32 %v434, 1.442695
        %v443 = vpow.pop %v442
        %v444 = vmul.f32 %v435, 1.442695
        %v445 = vpow.pop %v444
        %v446 = vmul.f32 %v436, 1.442695
        %v447 = vpow.pop %v446
        %v448 = vmul.f32 %v437, 1.442695
        %v449 = vpow.pop %v448
        %v450 = vmul.f32 %v438, 1.442695
        %v451 = vpow.pop %v450
        %v452 = vmul.f32 %v439, 1.442695
        %v453 = vpow.pop %v452
        %v454 = vmul.f32 %v440, 1.442695
        %v455 = vpow.pop %v454
        %v456 = vmul.f32 %v441, 1.442695
        %v457 = vpow.pop %v456
        %459 = vset.pattern.permute.xlu0 0
        %460 = vperm.xlu0 %459, %v426
        %v461 = vpop.permute.xlu0 %460
        %464 = vset.pattern.permute.xlu0 0
        %465 = vperm.xlu0 %464, %v427
        %v466 = vpop.permute.xlu0 %465
        %469 = vset.pattern.permute.xlu0 0
        %470 = vperm.xlu0 %469, %v428
        %v471 = vpop.permute.xlu0 %470
        %474 = vset.pattern.permute.xlu0 0
        %475 = vperm.xlu0 %474, %v429
        %v476 = vpop.permute.xlu0 %475
        %479 = vset.pattern.permute.xlu0 0
        %480 = vperm.xlu0 %479, %v430
        %v481 = vpop.permute.xlu0 %480
        %484 = vset.pattern.permute.xlu0 0
        %485 = vperm.xlu0 %484, %v431
        %v486 = vpop.permute.xlu0 %485
        %489 = vset.pattern.permute.xlu0 0
        %490 = vperm.xlu0 %489, %v432
        %v491 = vpop.permute.xlu0 %490
        %494 = vset.pattern.permute.xlu0 0
        %495 = vperm.xlu0 %494, %v433
        %v496 = vpop.permute.xlu0 %495
        %v498 = vsub.f32 %v370, %v461
        %v499 = vsub.f32 %v373, %v466
        %v500 = vsub.f32 %v376, %v471
        %v501 = vsub.f32 %v379, %v476
        %v502 = vsub.f32 %v382, %v481
        %v503 = vsub.f32 %v385, %v486
        %v504 = vsub.f32 %v388, %v491
        %v505 = vsub.f32 %v391, %v496
        %v506 = vmul.f32 %v498, 1.442695
        %v507 = vpow.pop %v506
        %v508 = vmul.f32 %v499, 1.442695
        %v509 = vpow.pop %v508
        %v510 = vmul.f32 %v500, 1.442695
        %v511 = vpow.pop %v510
        %v512 = vmul.f32 %v501, 1.442695
        %v513 = vpow.pop %v512
        %v514 = vmul.f32 %v502, 1.442695
        %v515 = vpow.pop %v514
        %v516 = vmul.f32 %v503, 1.442695
        %v517 = vpow.pop %v516
        %v518 = vmul.f32 %v504, 1.442695
        %v519 = vpow.pop %v518
        %v520 = vmul.f32 %v505, 1.442695
        %v521 = vpow.pop %v520
        %v522 = vld [vmem:[#allocation3] sm:$0xff]
        %v523 = vld [vmem:[#allocation3 + $0x8] sm:$0xff]
        %v524 = vld [vmem:[#allocation3 + $0x10] sm:$0xff]
        %v525 = vld [vmem:[#allocation3 + $0x18] sm:$0xff]
        %v526 = vld [vmem:[#allocation3 + $0x20] sm:$0xff]
        %v527 = vld [vmem:[#allocation3 + $0x28] sm:$0xff]
        %v528 = vld [vmem:[#allocation3 + $0x30] sm:$0xff]
        %v529 = vld [vmem:[#allocation3 + $0x38] sm:$0xff]
        %v530 = vmul.f32 %v443, %v522
        %v531 = vmul.f32 %v445, %v523
        %v532 = vmul.f32 %v447, %v524
        %v533 = vmul.f32 %v449, %v525
        %v534 = vmul.f32 %v451, %v526
        %v535 = vmul.f32 %v453, %v527
        %v536 = vmul.f32 %v455, %v528
        %v537 = vmul.f32 %v457, %v529
        %v538 = vsel %vm401, %v507, 0.0
        %539 = vadd.xlane.f32.xlu0 %v538
        %v540 = vpop.xlane.xlu0 %539
        %v541 = vsel %vm401, %v509, 0.0
        %542 = vadd.xlane.f32.xlu0 %v541
        %v543 = vpop.xlane.xlu0 %542
        %v544 = vsel %vm401, %v511, 0.0
        %545 = vadd.xlane.f32.xlu0 %v544
        %v546 = vpop.xlane.xlu0 %545
        %v547 = vsel %vm401, %v513, 0.0
        %548 = vadd.xlane.f32.xlu0 %v547
        %v549 = vpop.xlane.xlu0 %548
        %v550 = vsel %vm401, %v515, 0.0
        %551 = vadd.xlane.f32.xlu0 %v550
        %v552 = vpop.xlane.xlu0 %551
        %v553 = vsel %vm401, %v517, 0.0
        %554 = vadd.xlane.f32.xlu0 %v553
        %v555 = vpop.xlane.xlu0 %554
        %v556 = vsel %vm401, %v519, 0.0
        %557 = vadd.xlane.f32.xlu0 %v556
        %v558 = vpop.xlane.xlu0 %557
        %v559 = vsel %vm401, %v521, 0.0
        %560 = vadd.xlane.f32.xlu0 %v559
        %v561 = vpop.xlane.xlu0 %560
        %v562 = vadd.f32 %v530, %v540
        %v563 = vadd.f32 %v531, %v543
        %v564 = vadd.f32 %v532, %v546
        %v565 = vadd.f32 %v533, %v549
        %v566 = vadd.f32 %v534, %v552
        %v567 = vadd.f32 %v535, %v555
        %v568 = vadd.f32 %v536, %v558
        %v569 = vadd.f32 %v537, %v561
        %vm570 = vcmask 7168
        %571 = vst.msk [vmem:[#allocation3] sm:$0xff] %vm570, %v562
        %572 = vst.msk [vmem:[#allocation3 + $0x8] sm:$0xff] %vm570, %v563
        %573 = vst.msk [vmem:[#allocation3 + $0x10] sm:$0xff] %vm570, %v564
        %574 = vst.msk [vmem:[#allocation3 + $0x18] sm:$0xff] %vm570, %v565
        %575 = vst.msk [vmem:[#allocation3 + $0x20] sm:$0xff] %vm570, %v566
        %576 = vst.msk [vmem:[#allocation3 + $0x28] sm:$0xff] %vm570, %v567
        %577 = vst.msk [vmem:[#allocation3 + $0x30] sm:$0xff] %vm570, %v568
        %578 = vst.msk [vmem:[#allocation3 + $0x38] sm:$0xff] %vm570, %v569
        %v579 = vld [vmem:[#allocation4] sm:$0xff]
        %v580 = vld [vmem:[#allocation4 + $0x8] sm:$0xff]
        %v581 = vld [vmem:[#allocation4 + $0x10] sm:$0xff]
        %v582 = vld [vmem:[#allocation4 + $0x18] sm:$0xff]
        %v583 = vld [vmem:[#allocation4 + $0x20] sm:$0xff]
        %v584 = vld [vmem:[#allocation4 + $0x28] sm:$0xff]
        %v585 = vld [vmem:[#allocation4 + $0x30] sm:$0xff]
        %v586 = vld [vmem:[#allocation4 + $0x38] sm:$0xff]
        %588 = vset.pattern.permute.xlu0 0
        %589 = vperm.xlu0 %588, %v443
        %v590 = vpop.permute.xlu0 %589
        %593 = vset.pattern.permute.xlu0 0
        %594 = vperm.xlu0 %593, %v445
        %v595 = vpop.permute.xlu0 %594
        %598 = vset.pattern.permute.xlu0 0
        %599 = vperm.xlu0 %598, %v447
        %v600 = vpop.permute.xlu0 %599
        %603 = vset.pattern.permute.xlu0 0
        %604 = vperm.xlu0 %603, %v449
        %v605 = vpop.permute.xlu0 %604
        %608 = vset.pattern.permute.xlu0 0
        %609 = vperm.xlu0 %608, %v451
        %v610 = vpop.permute.xlu0 %609
        %613 = vset.pattern.permute.xlu0 0
        %614 = vperm.xlu0 %613, %v453
        %v615 = vpop.permute.xlu0 %614
        %618 = vset.pattern.permute.xlu0 0
        %619 = vperm.xlu0 %618, %v455
        %v620 = vpop.permute.xlu0 %619
        %623 = vset.pattern.permute.xlu0 0
        %624 = vperm.xlu0 %623, %v457
        %v625 = vpop.permute.xlu0 %624
        %v627 = vmul.f32 %v590, %v579
        %v628 = vmul.f32 %v595, %v580
        %v629 = vmul.f32 %v600, %v581
        %v630 = vmul.f32 %v605, %v582
        %v631 = vmul.f32 %v610, %v583
        %v632 = vmul.f32 %v615, %v584
        %v633 = vmul.f32 %v620, %v585
        %v634 = vmul.f32 %v625, %v586
        %v636 = vsel %vm401, %v507, 0
        %v639 = vsel %vm401, %v509, 0
        %v642 = vsel %vm401, %v511, 0
        %v645 = vsel %vm401, %v513, 0
        %v648 = vsel %vm401, %v515, 0
        %v651 = vsel %vm401, %v517, 0
        %v654 = vsel %vm401, %v519, 0
        %v657 = vsel %vm401, %v521, 0
        %659 = vmatpush.msra.mxu0 0.0
        %660 = vmatpush.msra.mxu0 0.0
        %661 = vmatpush.msra.mxu0 0.0
        %662 = vmatpush.msra.mxu0 0.0
        %663 = vmatpush.msra.mxu0 0.0
        %664 = vmatpush.msra.mxu0 0.0
        %665 = vmatpush.msra.mxu0 0.0
        %666 = vmatpush.msra.mxu0 0.0
        %667 = vmatpush.msra.mxu0 0.0
        %668 = vmatpush.msra.mxu0 0.0
        %669 = vmatpush.msra.mxu0 0.0
        %670 = vmatpush.msra.mxu0 0.0
        %671 = vmatpush.msra.mxu0 0.0
        %672 = vmatpush.msra.mxu0 0.0
        %673 = vmatpush.msra.mxu0 0.0
        %674 = vmatpush.msra.mxu0 %v323
        %675 = vmatmul.f32.gmra.mxu0 %v636
        %v676 = vpop.f32.mrf.mxu0
        %v677 = vadd.f32 0.0, %v676
        %678 = vmatmul.f32.gmra.mxu0 %v639
        %v679 = vpop.f32.mrf.mxu0
        %v680 = vadd.f32 0.0, %v679
        %681 = vmatmul.f32.gmra.mxu0 %v642
        %v682 = vpop.f32.mrf.mxu0
        %v683 = vadd.f32 0.0, %v682
        %684 = vmatmul.f32.gmra.mxu0 %v645
        %v685 = vpop.f32.mrf.mxu0
        %v686 = vadd.f32 0.0, %v685
        %687 = vmatmul.f32.gmra.mxu0 %v648
        %v688 = vpop.f32.mrf.mxu0
        %v689 = vadd.f32 0.0, %v688
        %690 = vmatmul.f32.gmra.mxu0 %v651
        %v691 = vpop.f32.mrf.mxu0
        %v692 = vadd.f32 0.0, %v691
        %693 = vmatmul.f32.gmra.mxu0 %v654
        %v694 = vpop.f32.mrf.mxu0
        %v695 = vadd.f32 0.0, %v694
        %696 = vmatmul.f32.gmra.mxu0 %v657
        %v697 = vpop.f32.mrf.mxu0
        %v698 = vadd.f32 0.0, %v697
        %699 = vdwg.mxu0
        %v700 = vadd.f32 %v627, %v677
        %v701 = vadd.f32 %v628, %v680
        %v702 = vadd.f32 %v629, %v683
        %v703 = vadd.f32 %v630, %v686
        %v704 = vadd.f32 %v631, %v689
        %v705 = vadd.f32 %v632, %v692
        %v706 = vadd.f32 %v633, %v695
        %v707 = vadd.f32 %v634, %v698
        %708 = vst.msk [vmem:[#allocation4] sm:$0xff] %vm324, %v700
        %709 = vst.msk [vmem:[#allocation4 + $0x8] sm:$0xff] %vm324, %v701
        %710 = vst.msk [vmem:[#allocation4 + $0x10] sm:$0xff] %vm324, %v702
        %711 = vst.msk [vmem:[#allocation4 + $0x18] sm:$0xff] %vm324, %v703
        %712 = vst.msk [vmem:[#allocation4 + $0x20] sm:$0xff] %vm324, %v704
        %713 = vst.msk [vmem:[#allocation4 + $0x28] sm:$0xff] %vm324, %v705
        %714 = vst.msk [vmem:[#allocation4 + $0x30] sm:$0xff] %vm324, %v706
        %715 = vst.msk [vmem:[#allocation4 + $0x38] sm:$0xff] %vm324, %v707
        %716 = vst.msk [vmem:[#allocation2] sm:$0xff] %vm570, %v426
        %717 = vst.msk [vmem:[#allocation2 + $0x8] sm:$0xff] %vm570, %v427
        %718 = vst.msk [vmem:[#allocation2 + $0x10] sm:$0xff] %vm570, %v428
        %719 = vst.msk [vmem:[#allocation2 + $0x18] sm:$0xff] %vm570, %v429
        %720 = vst.msk [vmem:[#allocation2 + $0x20] sm:$0xff] %vm570, %v430
        %721 = vst.msk [vmem:[#allocation2 + $0x28] sm:$0xff] %vm570, %v431
        %722 = vst.msk [vmem:[#allocation2 + $0x30] sm:$0xff] %vm570, %v432
        %723 = vst.msk [vmem:[#allocation2 + $0x38] sm:$0xff] %vm570, %v433
        // Predicated region
        $region41: #{tpu_custom_call.1} parent=35 // pred_check
          %p724 = pneg %p284
        $region42: #{tpu_custom_call.1} parent=35 // pred_check_branch
          %726 = sbr.rel (%p724) target = $region44
        $region43: #{tpu_custom_call.1} parent=35 // pred_region
          %v727 = vld [vmem:[#allocation4] sm:$0xff]
          %v728 = vld [vmem:[#allocation4 + $0x8] sm:$0xff]
          %v729 = vld [vmem:[#allocation4 + $0x10] sm:$0xff]
          %v730 = vld [vmem:[#allocation4 + $0x18] sm:$0xff]
          %v731 = vld [vmem:[#allocation4 + $0x20] sm:$0xff]
          %v732 = vld [vmem:[#allocation4 + $0x28] sm:$0xff]
          %v733 = vld [vmem:[#allocation4 + $0x30] sm:$0xff]
          %v734 = vld [vmem:[#allocation4 + $0x38] sm:$0xff]
          %v735 = vld [vmem:[#allocation3] sm:$0xff]
          %v736 = vld [vmem:[#allocation3 + $0x8] sm:$0xff]
          %v737 = vld [vmem:[#allocation3 + $0x10] sm:$0xff]
          %v738 = vld [vmem:[#allocation3 + $0x18] sm:$0xff]
          %v739 = vld [vmem:[#allocation3 + $0x20] sm:$0xff]
          %v740 = vld [vmem:[#allocation3 + $0x28] sm:$0xff]
          %v741 = vld [vmem:[#allocation3 + $0x30] sm:$0xff]
          %v742 = vld [vmem:[#allocation3 + $0x38] sm:$0xff]
          %v743 = vrcp.pop %v735
          %v744 = vrcp.pop %v736
          %v745 = vrcp.pop %v737
          %v746 = vrcp.pop %v738
          %v747 = vrcp.pop %v739
          %v748 = vrcp.pop %v740
          %v749 = vrcp.pop %v741
          %v750 = vrcp.pop %v742
          %752 = vset.pattern.permute.xlu0 0
          %753 = vperm.xlu0 %752, %v743
          %v754 = vpop.permute.xlu0 %753
          %757 = vset.pattern.permute.xlu0 0
          %758 = vperm.xlu0 %757, %v744
          %v759 = vpop.permute.xlu0 %758
          %762 = vset.pattern.permute.xlu0 0
          %763 = vperm.xlu0 %762, %v745
          %v764 = vpop.permute.xlu0 %763
          %767 = vset.pattern.permute.xlu0 0
          %768 = vperm.xlu0 %767, %v746
          %v769 = vpop.permute.xlu0 %768
          %772 = vset.pattern.permute.xlu0 0
          %773 = vperm.xlu0 %772, %v747
          %v774 = vpop.permute.xlu0 %773
          %777 = vset.pattern.permute.xlu0 0
          %778 = vperm.xlu0 %777, %v748
          %v779 = vpop.permute.xlu0 %778
          %782 = vset.pattern.permute.xlu0 0
          %783 = vperm.xlu0 %782, %v749
          %v784 = vpop.permute.xlu0 %783
          %787 = vset.pattern.permute.xlu0 0
          %788 = vperm.xlu0 %787, %v750
          %v789 = vpop.permute.xlu0 %788
          %v791 = vmul.f32 %v727, %v754
          %v792 = vmul.f32 %v728, %v759
          %v793 = vmul.f32 %v729, %v764
          %v794 = vmul.f32 %v730, %v769
          %v795 = vmul.f32 %v731, %v774
          %v796 = vmul.f32 %v732, %v779
          %v797 = vmul.f32 %v733, %v784
          %v798 = vmul.f32 %v734, %v789
          %800 = vrot.lane.b32.xlu0 %v792, 16
          %v801 = vpop.permute.xlu0 %800
          %804 = vrot.lane.b32.xlu0 %v793, 32
          %v805 = vpop.permute.xlu0 %804
          %808 = vrot.lane.b32.xlu0 %v794, 48
          %v809 = vpop.permute.xlu0 %808
          %812 = vrot.lane.b32.xlu0 %v795, 64
          %v813 = vpop.permute.xlu0 %812
          %816 = vrot.lane.b32.xlu0 %v796, 80
          %v817 = vpop.permute.xlu0 %816
          %820 = vrot.lane.b32.xlu0 %v797, 96
          %v821 = vpop.permute.xlu0 %820
          %824 = vrot.lane.b32.xlu0 %v798, 112
          %v825 = vpop.permute.xlu0 %824
          %v827 = vsel %vm324, %v791, %v801
          %vm828 = vcmask 261120
          %v829 = vsel %vm828, %v827, %v805
          %vm830 = vcmask 392192
          %v831 = vsel %vm830, %v829, %v809
          %vm832 = vcmask 523264
          %v833 = vsel %vm832, %v831, %v813
          %vm834 = vcmask 654336
          %v835 = vsel %vm834, %v833, %v817
          %vm836 = vcmask 785408
          %v837 = vsel %vm836, %v835, %v821
          %vm838 = vcmask 916480
          %v839 = vsel %vm838, %v837, %v825
          %v840 = vld [vmem:[%s3] sm:$0xff]
          %v841 = vld [vmem:[%s3 + $0x8] sm:$0xff]
          %v842 = vld [vmem:[%s3 + $0x10] sm:$0xff]
          %v843 = vld [vmem:[%s3 + $0x18] sm:$0xff]
          %v844 = vld [vmem:[%s3 + $0x20] sm:$0xff]
          %v845 = vld [vmem:[%s3 + $0x28] sm:$0xff]
          %v846 = vld [vmem:[%s3 + $0x30] sm:$0xff]
          %v847 = vld [vmem:[%s3 + $0x38] sm:$0xff]
          %v848 = vld [vmem:[%s3 + $0x40] sm:$0xff]
          %v849 = vld [vmem:[%s3 + $0x48] sm:$0xff]
          %v850 = vld [vmem:[%s3 + $0x50] sm:$0xff]
          %v851 = vld [vmem:[%s3 + $0x58] sm:$0xff]
          %v852 = vld [vmem:[%s3 + $0x60] sm:$0xff]
          %v853 = vld [vmem:[%s3 + $0x68] sm:$0xff]
          %v854 = vld [vmem:[%s3 + $0x70] sm:$0xff]
          %v855 = vld [vmem:[%s3 + $0x78] sm:$0xff]
          %856 = vmatpush.msra.mxu0 %v855
          %857 = vmatpush.msra.mxu0 %v854
          %858 = vmatpush.msra.mxu0 %v853
          %859 = vmatpush.msra.mxu0 %v852
          %860 = vmatpush.msra.mxu0 %v851
          %861 = vmatpush.msra.mxu0 %v850
          %862 = vmatpush.msra.mxu0 %v849
          %863 = vmatpush.msra.mxu0 %v848
          %864 = vmatpush.msra.mxu0 %v847
          %865 = vmatpush.msra.mxu0 %v846
          %866 = vmatpush.msra.mxu0 %v845
          %867 = vmatpush.msra.mxu0 %v844
          %868 = vmatpush.msra.mxu0 %v843
          %869 = vmatpush.msra.mxu0 %v842
          %870 = vmatpush.msra.mxu0 %v841
          %871 = vmatpush.msra.mxu0 %v840
          %872 = vmatmul.f32.gmra.mxu0 %v839
          %v873 = vpop.f32.mrf.mxu0
          %v874 = vadd.f32 0.0, %v873
          %875 = vdwg.mxu0
          %876 = vst.msk [vmem:[%s261] sm:$0xff] %vm828, %v874
        $region44: #{tpu_custom_call.1} parent=35 // pred_fallthru
          _
        %s877 = sand.u32 %s152, 1
        %s878 = scalar_lea.sflag [#allocation6], %s877
        %s879 = sand.u32 %s152, 1
        %s880 = smul.addr %s879, 8
        %s881 = scalar_lea.vmem [#allocation5], %s880
        // Predicated region
        $region45: #{tpu_custom_call.1} parent=35 // pred_check
          %p882 = pneg %p162
        $region46: #{tpu_custom_call.1} parent=35 // pred_check_branch
          %884 = sbr.rel (%p882) target = $region48
        $region47: #{tpu_custom_call.1} parent=35 // pred_region
          %886 = vsyncadd %s878, 0
          %s887 = sadd.s32 %s24, %s23
          %s888 = smul.addr %s887, 8
          %s889 = scalar_lea.hbm %s4, %s888
          %s891 = sshll.u32 %s881, 4
          %s892 = int_to_ptr.vmem [resolvable:$true] %s891
          %s893 = sshll.u32 %s889, 4
          %s894 = int_to_ptr.hbm [resolvable:$true] %s893
          %896 = dma.vmem_to_hbm [thread:$0]  %s892, 128, %s894, %s878
        $region48: #{tpu_custom_call.1} parent=35 // pred_fallthru
          _
      $region36: #{tpu_custom_call.1} parent=5 // pred_fallthru
        _
      %p897 = scmp.le.s32.totalorder 2, %s13
      // Predicated region
      $region49: #{tpu_custom_call.1} parent=5 // pred_check
        %p898 = pneg %p897
      $region50: #{tpu_custom_call.1} parent=5 // pred_check_branch
        %900 = sbr.rel (%p898) target = $region52
      $region51: #{tpu_custom_call.1} parent=5 // pred_region
        %s901 = ssub.s32 %s13, 2
        // Predicated region
        $region53: #{tpu_custom_call.1} parent=51 // pred_check
          %p902 = pneg %p168
        $region54: #{tpu_custom_call.1} parent=51 // pred_check_branch
          %904 = sbr.rel (%p902) target = $region56
        $region55: #{tpu_custom_call.1} parent=51 // pred_region
          %s905 = sand.u32 %s153, 1
          %s906 = scalar_lea.sflag [#allocation6], %s905
          %s907 = sand.u32 %s153, 1
          %s908 = smul.addr %s907, 8
          %s909 = scalar_lea.vmem [#allocation5], %s908
          %911 = dma.done %s906, 128
        $region56: #{tpu_custom_call.1} parent=51 // pred_fallthru
          _
      $region52: #{tpu_custom_call.1} parent=5 // pred_fallthru
        _
    $region6: #{tpu_custom_call.1} parent=1 // loop_footer
      %s17 = sadd.s32 1, %s13
    $region7: #{tpu_custom_call.1} parent=1 // loop_footer_branch
      %12 = sbr.rel target = $region3
    $region8: #{tpu_custom_call.1} parent=1 // loop_exit
      _
    %912 = vsyncpa [#allocation6], 1
    %s913 = scalar_lea.sflag [#allocation6], 1
    %914 = vsyncpa %s913, 1

// kernel: tpu_custom_call.1
$region0: #{tpu_custom_call.1}
  #allocation0 [shape = 'u32[]', space=smem, size = 0x4, offset = 0x4, fixed_abs, tag = 'smem constant byte address 0x4 - core index']
  #allocation1 [shape = 'u32[72,128]{1,0:T(1,128)}', space=vmem, size = 0x9000, scoped, tag = 'internal scratch']
  #allocation2 [shape = 'f32[64,1]{1,0:T(8,128)}', space=vmem, size = 0x8000, scoped, tag = 'scratch operand']
  #allocation3 [shape = 'f32[64,1]{1,0:T(8,128)}', space=vmem, size = 0x8000, scoped, tag = 'scratch operand']
  #allocation4 [shape = 'f32[64,16]{1,0:T(8,128)}', space=vmem, size = 0x8000, scoped, tag = 'scratch operand']
  %s0 = inlined_call_operand.vmem [shape: f32[2,8,8,16], index: 0, kind: input, shape index: {}]
  %s1 = inlined_call_operand.vmem [shape: f32[2,8,16], index: 1, kind: input, shape index: {}]
  %s2 = inlined_call_operand.vmem [shape: f32[2,8,16], index: 2, kind: input, shape index: {}]
  %s3 = inlined_call_operand.vmem [shape: f32[128,32], index: 3, kind: input, shape index: {}]
  %s4 = inlined_call_operand.hbm [shape: f32[2,8,32], index: 4, kind: output, shape index: {}]
  %s5 = sld [smem:[#allocation0]]
  $region57: #{tpu_custom_call.1} parent=0
    _
  %s7 = ssub.s32 1, %s5
  %s8 = scalar_select 0, %s7, %s5
  $region1: #{tpu_custom_call.1} parent=0
    #allocation5 [shape = 'u8[8192]{0}', space=vmem, size = 0x2000, scoped, tag = 'output window, operand 0']
    #allocation6 [shape = 's32[2]{0}', space=sflag, size = 0x8, scoped, tag = 'scoped memory for tpu_custom_call.1']
    %9 = vsyncpa [#allocation6], 0
    %s10 = scalar_lea.sflag [#allocation6], 1
    %11 = vsyncpa %s10, 0
    loop: start=0, step=1, limit=4
    $region2: #{tpu_custom_call.1} parent=1 // loop_pre_header
      _
    $region3: #{tpu_custom_call.1} parent=1 // loop_header
      %s13 = sphi 0, %s17
      %p14 = scmp.ge.s32.totalorder %s13, 4
      %s20 = sphi 0, %s39
      %s21 = sphi 0, %s35
      %s22 = sphi 0, %s31
      %s23 = sphi 0, %s20
      %s24 = sphi 0, %s21
      %s25 = sphi 0, %s22
      %s26 = sphi 0, %s23
      %s27 = sphi 0, %s24
      %s28 = sphi 0, %s25
      %s44 = sphi 0, %s46
      %s47 = sphi 0, %s44
      %s48 = sphi 0, %s47
      %s64 = sphi 0, %s48
      %s72 = sphi 0, %s74
      %s75 = sphi 0, %s72
      %s76 = sphi 0, %s75
      %s92 = sphi 0, %s76
      %s100 = sphi 0, %s102
      %s103 = sphi 0, %s100
      %s104 = sphi 0, %s103
      %s120 = sphi 0, %s104
      %s124 = sphi 0, %s124
      %s126 = sphi 0, %s124
      %s127 = sphi 0, %s126
      %s141 = sphi 0, %s127
      %s149 = sphi 0, %s151
      %s152 = sphi 0, %s149
      %s153 = sphi 0, %s152
      %s169 = sphi 0, %s153
    $region4: #{tpu_custom_call.1} parent=1 // loop_header_branch
      %16 = sbr.rel (%p14) target = $region8
    $region5: #{tpu_custom_call.1} parent=1 // loop_body
      %s18 = ssub.s32 %s13, 1
      %s19 = ssub.s32 %s13, 2
      %s29 = sadd.s32 1, %s22
      %p30 = scmp.ge.s32.totalorder %s29, 1
      %s31 = scalar_select %p30, 0, %s29
      %s32 = sadd.s32 1, %s21
      %s33 = scalar_select %p30, %s32, %s21
      %p34 = scmp.ge.s32.totalorder %s33, 1
      %s35 = scalar_select %p34, 0, %s33
      %s36 = sadd.s32 1, %s20
      %s37 = scalar_select %p34, %s36, %s20
      %p38 = scmp.ge.s32.totalorder %s37, 2
      %s39 = scalar_select %p38, 0, %s37
      %s40 = ssub.s32 %s20, %s39
      %s41 = ssub.s32 %s21, %s35
      %s42 = sor.u32 %s40, %s41
      %p43 = scmp.eq.s32.totalorder %s42, 0
      %s45 = sadd.s32 %s44, 1
      %s46 = scalar_select %p43, %s44, %s45
      %p49 = pneg %p43
      %p50 = scmp.eq.s32.totalorder %s13, 1
      %p51 = por %p49, %p50
      %p52 = scmp.ne.s32.totalorder %s44, %s47
      %p53 = scmp.eq.s32.totalorder %s13, 0
      %p54 = por %p52, %p53
      %p55 = scmp.ne.s32.totalorder %s44, %s47
      %p56 = scmp.eq.s32.totalorder %s18, 1
      %p57 = por %p55, %p56
      %p58 = scmp.ne.s32.totalorder %s47, %s48
      %p59 = scmp.eq.s32.totalorder %s18, 0
      %p60 = por %p58, %p59
      %p61 = scmp.ne.s32.totalorder %s47, %s48
      %p62 = scmp.eq.s32.totalorder %s19, 1
      %p63 = por %p61, %p62
      %p65 = scmp.ne.s32.totalorder %s48, %s64
      %p66 = scmp.eq.s32.totalorder %s19, 0
      %p67 = por %p65, %p66
      %s68 = ssub.s32 %s20, %s39
      %s69 = ssub.s32 %s22, %s31
      %s70 = sor.u32 %s68, %s69
      %p71 = scmp.eq.s32.totalorder %s70, 0
      %s73 = sadd.s32 %s72, 1
      %s74 = scalar_select %p71, %s72, %s73
      %p77 = pneg %p71
      %p78 = scmp.eq.s32.totalorder %s13, 1
      %p79 = por %p77, %p78
      %p80 = scmp.ne.s32.totalorder %s72, %s75
      %p81 = scmp.eq.s32.totalorder %s13, 0
      %p82 = por %p80, %p81
      %p83 = scmp.ne.s32.totalorder %s72, %s75
      %p84 = scmp.eq.s32.totalorder %s18, 1
      %p85 = por %p83, %p84
      %p86 = scmp.ne.s32.totalorder %s75, %s76
      %p87 = scmp.eq.s32.totalorder %s18, 0
      %p88 = por %p86, %p87
      %p89 = scmp.ne.s32.totalorder %s75, %s76
      %p90 = scmp.eq.s32.totalorder %s19, 1
      %p91 = por %p89, %p90
      %p93 = scmp.ne.s32.totalorder %s76, %s92
      %p94 = scmp.eq.s32.totalorder %s19, 0
      %p95 = por %p93, %p94
      %s96 = ssub.s32 %s20, %s39
      %s97 = ssub.s32 %s22, %s31
      %s98 = sor.u32 %s96, %s97
      %p99 = scmp.eq.s32.totalorder %s98, 0
      %s101 = sadd.s32 %s100, 1
      %s102 = scalar_select %p99, %s100, %s101
      %p105 = pneg %p99
      %p106 = scmp.eq.s32.totalorder %s13, 1
      %p107 = por %p105, %p106
      %p108 = scmp.ne.s32.totalorder %s100, %s103
      %p109 = scmp.eq.s32.totalorder %s13, 0
      %p110 = por %p108, %p109
      %p111 = scmp.ne.s32.totalorder %s100, %s103
      %p112 = scmp.eq.s32.totalorder %s18, 1
      %p113 = por %p111, %p112
      %p114 = scmp.ne.s32.totalorder %s103, %s104
      %p115 = scmp.eq.s32.totalorder %s18, 0
      %p116 = por %p114, %p115
      %p117 = scmp.ne.s32.totalorder %s103, %s104
      %p118 = scmp.eq.s32.totalorder %s19, 1
      %p119 = por %p117, %p118
      %p121 = scmp.ne.s32.totalorder %s104, %s120
      %p122 = scmp.eq.s32.totalorder %s19, 0
      %p123 = por %p121, %p122
      %s125 = sadd.s32 %s124, 1
      %p128 = scmp.eq.s32.totalorder %s13, 1
      %p129 = scmp.ne.s32.totalorder %s124, %s126
      %p130 = scmp.eq.s32.totalorder %s13, 0
      %p131 = por %p129, %p130
      %p132 = scmp.ne.s32.totalorder %s124, %s126
      %p133 = scmp.eq.s32.totalorder %s18, 1
      %p134 = por %p132, %p133
      %p135 = scmp.ne.s32.totalorder %s126, %s127
      %p136 = scmp.eq.s32.totalorder %s18, 0
      %p137 = por %p135, %p136
      %p138 = scmp.ne.s32.totalorder %s126, %s127
      %p139 = scmp.eq.s32.totalorder %s19, 1
      %p140 = por %p138, %p139
      %p142 = scmp.ne.s32.totalorder %s127, %s141
      %p143 = scmp.eq.s32.totalorder %s19, 0
      %p144 = por %p142, %p143
      %s145 = ssub.s32 %s20, %s39
      %s146 = ssub.s32 %s21, %s35
      %s147 = sor.u32 %s145, %s146
      %p148 = scmp.eq.s32.totalorder %s147, 0
      %s150 = sadd.s32 %s149, 1
      %s151 = scalar_select %p148, %s149, %s150
      %p154 = pneg %p148
      %p155 = scmp.eq.s32.totalorder %s13, 1
      %p156 = por %p154, %p155
      %p157 = scmp.ne.s32.totalorder %s149, %s152
      %p158 = scmp.eq.s32.totalorder %s13, 0
      %p159 = por %p157, %p158
      %p160 = scmp.ne.s32.totalorder %s149, %s152
      %p161 = scmp.eq.s32.totalorder %s18, 1
      %p162 = por %p160, %p161
      %p163 = scmp.ne.s32.totalorder %s152, %s153
      %p164 = scmp.eq.s32.totalorder %s18, 0
      %p165 = por %p163, %p164
      %p166 = scmp.ne.s32.totalorder %s152, %s153
      %p167 = scmp.eq.s32.totalorder %s19, 1
      %p168 = por %p166, %p167
      %p170 = scmp.ne.s32.totalorder %s153, %s169
      %p171 = scmp.eq.s32.totalorder %s19, 0
      %p172 = por %p170, %p171
      %p173 = scmp.le.s32.totalorder 1, %s13
      %p174 = scmp.lt.s32.totalorder %s13, 3
      %p175 = pnand %p173, %p174
      %p176 = pneg %p175
      // Predicated region
      $region9: #{tpu_custom_call.1} parent=5 // pred_check
        _
      $region10: #{tpu_custom_call.1} parent=5 // pred_check_branch
        %178 = sbr.rel (%p175) target = $region12
      $region11: #{tpu_custom_call.1} parent=5 // pred_region
        %s179 = ssub.s32 %s13, 1
        // Predicated region
        $region13: #{tpu_custom_call.1} parent=11 // pred_check
          %p180 = pneg %p137
        $region14: #{tpu_custom_call.1} parent=11 // pred_check_branch
          %182 = sbr.rel (%p180) target = $region16
        $region15: #{tpu_custom_call.1} parent=11 // pred_region
          _
        $region16: #{tpu_custom_call.1} parent=11 // pred_fallthru
          _
      $region12: #{tpu_custom_call.1} parent=5 // pred_fallthru
        _
      %p183 = scmp.lt.s32.totalorder %s13, 2
      // Predicated region
      $region17: #{tpu_custom_call.1} parent=5 // pred_check
        %p184 = pneg %p183
      $region18: #{tpu_custom_call.1} parent=5 // pred_check_branch
        %186 = sbr.rel (%p184) target = $region20
      $region19: #{tpu_custom_call.1} parent=5 // pred_region
        // Predicated region
        $region21: #{tpu_custom_call.1} parent=19 // pred_check
          %p187 = pneg %p54
        $region22: #{tpu_custom_call.1} parent=19 // pred_check_branch
          %189 = sbr.rel (%p187) target = $region24
        $region23: #{tpu_custom_call.1} parent=19 // pred_region
          %p190 = scmp.lt.s32.totalorder %s20, 1
          %s191 = scalar_select %p190, %s20, 1
          %p192 = scmp.lt.s32.totalorder %s21, 0
          %s193 = scalar_select %p192, %s21, 0
          %s194 = smul.addr %s191, 8
          %s195 = sadd.s32 %s193, %s194
          %s196 = smul.addr %s195, 8
          %s197 = scalar_lea.vmem %s0, %s196
        $region24: #{tpu_custom_call.1} parent=19 // pred_fallthru
          _
        // Predicated region
        $region25: #{tpu_custom_call.1} parent=19 // pred_check
          %p198 = pneg %p82
        $region26: #{tpu_custom_call.1} parent=19 // pred_check_branch
          %200 = sbr.rel (%p198) target = $region28
        $region27: #{tpu_custom_call.1} parent=19 // pred_region
          %p201 = scmp.lt.s32.totalorder %s20, 1
          %s202 = scalar_select %p201, %s20, 1
          %p203 = scmp.lt.s32.totalorder %s22, 0
          %s204 = scalar_select %p203, %s22, 0
          %s205 = sadd.s32 %s204, %s202
          %s206 = smul.addr %s205, 8
          %s207 = scalar_lea.vmem %s1, %s206
        $region28: #{tpu_custom_call.1} parent=19 // pred_fallthru
          _
        // Predicated region
        $region29: #{tpu_custom_call.1} parent=19 // pred_check
          %p208 = pneg %p110
        $region30: #{tpu_custom_call.1} parent=19 // pred_check_branch
          %210 = sbr.rel (%p208) target = $region32
        $region31: #{tpu_custom_call.1} parent=19 // pred_region
          %p211 = scmp.lt.s32.totalorder %s20, 1
          %s212 = scalar_select %p211, %s20, 1
          %p213 = scmp.lt.s32.totalorder %s22, 0
          %s214 = scalar_select %p213, %s22, 0
          %s215 = sadd.s32 %s214, %s212
          %s216 = smul.addr %s215, 8
          %s217 = scalar_lea.vmem %s2, %s216
        $region32: #{tpu_custom_call.1} parent=19 // pred_fallthru
          _
      $region20: #{tpu_custom_call.1} parent=5 // pred_fallthru
        _
      %p218 = scmp.le.s32.totalorder 1, %s13
      %p219 = scmp.lt.s32.totalorder %s13, 3
      %p220 = pnand %p218, %p219
      %p221 = pneg %p220
      // Predicated region
      $region33: #{tpu_custom_call.1} parent=5 // pred_check
        _
      $region34: #{tpu_custom_call.1} parent=5 // pred_check_branch
        %223 = sbr.rel (%p220) target = $region36
      $region35: #{tpu_custom_call.1} parent=5 // pred_region
        %s224 = ssub.s32 %s13, 1
        %p225 = scmp.lt.s32.totalorder %s23, 1
        %s226 = scalar_select %p225, %s23, 1
        %p227 = scmp.lt.s32.totalorder %s24, 0
        %s228 = scalar_select %p227, %s24, 0
        %s229 = smul.addr %s226, 8
        %s230 = sadd.s32 %s228, %s229
        %s231 = smul.addr %s230, 8
        %s232 = scalar_lea.vmem %s0, %s231
        %p233 = pneg %p60
        %p234 = pneg %p57
        %p235 = scmp.lt.s32.totalorder %s23, 1
        %s236 = scalar_select %p235, %s23, 1
        %p237 = scmp.lt.s32.totalorder %s25, 0
        %s238 = scalar_select %p237, %s25, 0
        %s239 = sadd.s32 %s238, %s236
        %s240 = smul.addr %s239, 8
        %s241 = scalar_lea.vmem %s1, %s240
        %p242 = pneg %p88
        %p243 = pneg %p85
        %p244 = scmp.lt.s32.totalorder %s23, 1
        %s245 = scalar_select %p244, %s23, 1
        %p246 = scmp.lt.s32.totalorder %s25, 0
        %s247 = scalar_select %p246, %s25, 0
        %s248 = sadd.s32 %s247, %s245
        %s249 = smul.addr %s248, 8
        %s250 = scalar_lea.vmem %s2, %s249
        %p251 = pneg %p116
        %p252 = pneg %p113
        %p253 = pneg %p137
        %p254 = pneg %p134
        %p255 = pneg %p165
        %p256 = pneg %p162
        %s257 = sand.u32 %s152, 1
        %s258 = scalar_lea.sflag [#allocation6], %s257
        %s259 = sand.u32 %s152, 1
        %s260 = smul.addr %s259, 8
        %s261 = scalar_lea.vmem [#allocation5], %s260
        %p262 = scmp.lt.s32.totalorder %s23, 1
        %s263 = scalar_select %p262, %s23, 1
        %p264 = scmp.lt.s32.totalorder %s24, 0
        %s265 = scalar_select %p264, %s24, 0
        %s266 = smul.addr %s263, 8
        %s267 = sadd.s32 %s265, %s266
        %s268 = smul.addr %s267, 8
        %s269 = scalar_lea.vmem %s0, %s268
        %p270 = scmp.lt.s32.totalorder %s23, 1
        %s271 = scalar_select %p270, %s23, 1
        %p272 = scmp.lt.s32.totalorder %s25, 0
        %s273 = scalar_select %p272, %s25, 0
        %s274 = sadd.s32 %s273, %s271
        %s275 = smul.addr %s274, 8
        %s276 = scalar_lea.vmem %s1, %s275
        %p277 = scmp.lt.s32.totalorder %s23, 1
        %s278 = scalar_select %p277, %s23, 1
        %p279 = scmp.lt.s32.totalorder %s25, 0
        %s280 = scalar_select %p279, %s25, 0
        %s281 = sadd.s32 %s280, %s278
        %s282 = smul.addr %s281, 8
        %s283 = scalar_lea.vmem %s2, %s282
        %p284 = scmp.eq.s32.totalorder %s25, 0
        // Predicated region
        $region37: #{tpu_custom_call.1} parent=35 // pred_check
          %p285 = pneg %p284
        $region38: #{tpu_custom_call.1} parent=35 // pred_check_branch
          %287 = sbr.rel (%p285) target = $region40
        $region39: #{tpu_custom_call.1} parent=35 // pred_region
          %vm288 = vcmask 7168
          %289 = vst.msk [vmem:[#allocation2] sm:$0xff] %vm288, -inf
          %290 = vst.msk [vmem:[#allocation2 + $0x8] sm:$0xff] %vm288, -inf
          %291 = vst.msk [vmem:[#allocation2 + $0x10] sm:$0xff] %vm288, -inf
          %292 = vst.msk [vmem:[#allocation2 + $0x18] sm:$0xff] %vm288, -inf
          %293 = vst.msk [vmem:[#allocation2 + $0x20] sm:$0xff] %vm288, -inf
          %294 = vst.msk [vmem:[#allocation2 + $0x28] sm:$0xff] %vm288, -inf
          %295 = vst.msk [vmem:[#allocation2 + $0x30] sm:$0xff] %vm288, -inf
          %296 = vst.msk [vmem:[#allocation2 + $0x38] sm:$0xff] %vm288, -inf
          %297 = vst.msk [vmem:[#allocation3] sm:$0xff] %vm288, 0.0
          %298 = vst.msk [vmem:[#allocation3 + $0x8] sm:$0xff] %vm288, 0.0
          %299 = vst.msk [vmem:[#allocation3 + $0x10] sm:$0xff] %vm288, 0.0
          %300 = vst.msk [vmem:[#allocation3 + $0x18] sm:$0xff] %vm288, 0.0
          %301 = vst.msk [vmem:[#allocation3 + $0x20] sm:$0xff] %vm288, 0.0
          %302 = vst.msk [vmem:[#allocation3 + $0x28] sm:$0xff] %vm288, 0.0
          %303 = vst.msk [vmem:[#allocation3 + $0x30] sm:$0xff] %vm288, 0.0
          %304 = vst.msk [vmem:[#allocation3 + $0x38] sm:$0xff] %vm288, 0.0
          %vm305 = vcmask 130048
          %306 = vst.msk [vmem:[#allocation4] sm:$0xff] %vm305, 0.0
          %307 = vst.msk [vmem:[#allocation4 + $0x8] sm:$0xff] %vm305, 0.0
          %308 = vst.msk [vmem:[#allocation4 + $0x10] sm:$0xff] %vm305, 0.0
          %309 = vst.msk [vmem:[#allocation4 + $0x18] sm:$0xff] %vm305, 0.0
          %310 = vst.msk [vmem:[#allocation4 + $0x20] sm:$0xff] %vm305, 0.0
          %311 = vst.msk [vmem:[#allocation4 + $0x28] sm:$0xff] %vm305, 0.0
          %312 = vst.msk [vmem:[#allocation4 + $0x30] sm:$0xff] %vm305, 0.0
          %313 = vst.msk [vmem:[#allocation4 + $0x38] sm:$0xff] %vm305, 0.0
        $region40: #{tpu_custom_call.1} parent=35 // pred_fallthru
          _
        %v314 = vld [vmem:[%s269] sm:$0xff]
        %v315 = vld [vmem:[%s269 + $0x8] sm:$0xff]
        %v316 = vld [vmem:[%s269 + $0x10] sm:$0xff]
        %v317 = vld [vmem:[%s269 + $0x18] sm:$0xff]
        %v318 = vld [vmem:[%s269 + $0x20] sm:$0xff]
        %v319 = vld [vmem:[%s269 + $0x28] sm:$0xff]
        %v320 = vld [vmem:[%s269 + $0x30] sm:$0xff]
        %v321 = vld [vmem:[%s269 + $0x38] sm:$0xff]
        %v322 = vld [vmem:[%s276] sm:$0xff]
        %v323 = vld [vmem:[%s283] sm:$0xff]
        %vm324 = vcmask 130048
        %v326 = vsel %vm324, %v314, 0
        %v329 = vsel %vm324, %v315, 0
        %v332 = vsel %vm324, %v316, 0
        %v335 = vsel %vm324, %v317, 0
        %v338 = vsel %vm324, %v318, 0
        %v341 = vsel %vm324, %v319, 0
        %v344 = vsel %vm324, %v320, 0
        %v347 = vsel %vm324, %v321, 0
        %v350 = vsel %vm324, %v322, 0
        %352 = vmatpush.xpose.msra.mxu0 0.0
        %353 = vmatpush.xpose.msra.mxu0 0.0
        %354 = vmatpush.xpose.msra.mxu0 0.0
        %355 = vmatpush.xpose.msra.mxu0 0.0
        %356 = vmatpush.xpose.msra.mxu0 0.0
        %357 = vmatpush.xpose.msra.mxu0 0.0
        %358 = vmatpush.xpose.msra.mxu0 0.0
        %359 = vmatpush.xpose.msra.mxu0 0.0
        %360 = vmatpush.xpose.msra.mxu0 0.0
        %361 = vmatpush.xpose.msra.mxu0 0.0
        %362 = vmatpush.xpose.msra.mxu0 0.0
        %363 = vmatpush.xpose.msra.mxu0 0.0
        %364 = vmatpush.xpose.msra.mxu0 0.0
        %365 = vmatpush.xpose.msra.mxu0 0.0
        %366 = vmatpush.xpose.msra.mxu0 0.0
        %367 = vmatpush.xpose.msra.mxu0 %v350
        %368 = vmatmul.f32.gmra.mxu0 %v326
        %v369 = vpop.f32.mrf.mxu0
        %v370 = vadd.f32 0.0, %v369
        %371 = vmatmul.f32.gmra.mxu0 %v329
        %v372 = vpop.f32.mrf.mxu0
        %v373 = vadd.f32 0.0, %v372
        %374 = vmatmul.f32.gmra.mxu0 %v332
        %v375 = vpop.f32.mrf.mxu0
        %v376 = vadd.f32 0.0, %v375
        %377 = vmatmul.f32.gmra.mxu0 %v335
        %v378 = vpop.f32.mrf.mxu0
        %v379 = vadd.f32 0.0, %v378
        %380 = vmatmul.f32.gmra.mxu0 %v338
        %v381 = vpop.f32.mrf.mxu0
        %v382 = vadd.f32 0.0, %v381
        %383 = vmatmul.f32.gmra.mxu0 %v341
        %v384 = vpop.f32.mrf.mxu0
        %v385 = vadd.f32 0.0, %v384
        %386 = vmatmul.f32.gmra.mxu0 %v344
        %v387 = vpop.f32.mrf.mxu0
        %v388 = vadd.f32 0.0, %v387
        %389 = vmatmul.f32.gmra.mxu0 %v347
        %v390 = vpop.f32.mrf.mxu0
        %v391 = vadd.f32 0.0, %v390
        %392 = vdwg.mxu0
        %v393 = vld [vmem:[#allocation2] sm:$0xff]
        %v394 = vld [vmem:[#allocation2 + $0x8] sm:$0xff]
        %v395 = vld [vmem:[#allocation2 + $0x10] sm:$0xff]
        %v396 = vld [vmem:[#allocation2 + $0x18] sm:$0xff]
        %v397 = vld [vmem:[#allocation2 + $0x20] sm:$0xff]
        %v398 = vld [vmem:[#allocation2 + $0x28] sm:$0xff]
        %v399 = vld [vmem:[#allocation2 + $0x30] sm:$0xff]
        %v400 = vld [vmem:[#allocation2 + $0x38] sm:$0xff]
        %vm401 = vcmask 64512
        %v402 = vsel %vm401, %v370, -inf
        %403 = vmax.xlane.f32.xlu0 %v402
        %v404 = vpop.xlane.xlu0 %403
        %v405 = vsel %vm401, %v373, -inf
        %406 = vmax.xlane.f32.xlu0 %v405
        %v407 = vpop.xlane.xlu0 %406
        %v408 = vsel %vm401, %v376, -inf
        %409 = vmax.xlane.f32.xlu0 %v408
        %v410 = vpop.xlane.xlu0 %409
        %v411 = vsel %vm401, %v379, -inf
        %412 = vmax.xlane.f32.xlu0 %v411
        %v413 = vpop.xlane.xlu0 %412
        %v414 = vsel %vm401, %v382, -inf
        %415 = vmax.xlane.f32.xlu0 %v414
        %v416 = vpop.xlane.xlu0 %415
        %v417 = vsel %vm401, %v385, -inf
        %418 = vmax.xlane.f32.xlu0 %v417
        %v419 = vpop.xlane.xlu0 %418
        %v420 = vsel %vm401, %v388, -inf
        %421 = vmax.xlane.f32.xlu0 %v420
        %v422 = vpop.xlane.xlu0 %421
        %v423 = vsel %vm401, %v391, -inf
        %424 = vmax.xlane.f32.xlu0 %v423
        %v425 = vpop.xlane.xlu0 %424
        %v426 = vmax.f32 %v393, %v404
        %v427 = vmax.f32 %v394, %v407
        %v428 = vmax.f32 %v395, %v410
        %v429 = vmax.f32 %v396, %v413
        %v430 = vmax.f32 %v397, %v416
        %v431 = vmax.f32 %v398, %v419
        %v432 = vmax.f32 %v399, %v422
        %v433 = vmax.f32 %v400, %v425
        %v434 = vsub.f32 %v393, %v426
        %v435 = vsub.f32 %v394, %v427
        %v436 = vsub.f32 %v395, %v428
        %v437 = vsub.f32 %v396, %v429
        %v438 = vsub.f32 %v397, %v430
        %v439 = vsub.f32 %v398, %v431
        %v440 = vsub.f32 %v399, %v432
        %v441 = vsub.f32 %v400, %v433
        %v442 = vmul.f32 %v434, 1.442695
        %v443 = vpow.pop %v442
        %v444 = vmul.f32 %v435, 1.442695
        %v445 = vpow.pop %v444
        %v446 = vmul.f32 %v436, 1.442695
        %v447 = vpow.pop %v446
        %v448 = vmul.f32 %v437, 1.442695
        %v449 = vpow.pop %v448
        %v450 = vmul.f32 %v438, 1.442695
        %v451 = vpow.pop %v450
        %v452 = vmul.f32 %v439, 1.442695
        %v453 = vpow.pop %v452
        %v454 = vmul.f32 %v440, 1.442695
        %v455 = vpow.pop %v454
        %v456 = vmul.f32 %v441, 1.442695
        %v457 = vpow.pop %v456
        %459 = vset.pattern.permute.xlu0 0
        %460 = vperm.xlu0 %459, %v426
        %v461 = vpop.permute.xlu0 %460
        %464 = vset.pattern.permute.xlu0 0
        %465 = vperm.xlu0 %464, %v427
        %v466 = vpop.permute.xlu0 %465
        %469 = vset.pattern.permute.xlu0 0
        %470 = vperm.xlu0 %469, %v428
        %v471 = vpop.permute.xlu0 %470
        %474 = vset.pattern.permute.xlu0 0
        %475 = vperm.xlu0 %474, %v429
        %v476 = vpop.permute.xlu0 %475
        %479 = vset.pattern.permute.xlu0 0
        %480 = vperm.xlu0 %479, %v430
        %v481 = vpop.permute.xlu0 %480
        %484 = vset.pattern.permute.xlu0 0
        %485 = vperm.xlu0 %484, %v431
        %v486 = vpop.permute.xlu0 %485
        %489 = vset.pattern.permute.xlu0 0
        %490 = vperm.xlu0 %489, %v432
        %v491 = vpop.permute.xlu0 %490
        %494 = vset.pattern.permute.xlu0 0
        %495 = vperm.xlu0 %494, %v433
        %v496 = vpop.permute.xlu0 %495
        %v498 = vsub.f32 %v370, %v461
        %v499 = vsub.f32 %v373, %v466
        %v500 = vsub.f32 %v376, %v471
        %v501 = vsub.f32 %v379, %v476
        %v502 = vsub.f32 %v382, %v481
        %v503 = vsub.f32 %v385, %v486
        %v504 = vsub.f32 %v388, %v491
        %v505 = vsub.f32 %v391, %v496
        %v506 = vmul.f32 %v498, 1.442695
        %v507 = vpow.pop %v506
        %v508 = vmul.f32 %v499, 1.442695
        %v509 = vpow.pop %v508
        %v510 = vmul.f32 %v500, 1.442695
        %v511 = vpow.pop %v510
        %v512 = vmul.f32 %v501, 1.442695
        %v513 = vpow.pop %v512
        %v514 = vmul.f32 %v502, 1.442695
        %v515 = vpow.pop %v514
        %v516 = vmul.f32 %v503, 1.442695
        %v517 = vpow.pop %v516
        %v518 = vmul.f32 %v504, 1.442695
        %v519 = vpow.pop %v518
        %v520 = vmul.f32 %v505, 1.442695
        %v521 = vpow.pop %v520
        %v522 = vld [vmem:[#allocation3] sm:$0xff]
        %v523 = vld [vmem:[#allocation3 + $0x8] sm:$0xff]
        %v524 = vld [vmem:[#allocation3 + $0x10] sm:$0xff]
        %v525 = vld [vmem:[#allocation3 + $0x18] sm:$0xff]
        %v526 = vld [vmem:[#allocation3 + $0x20] sm:$0xff]
        %v527 = vld [vmem:[#allocation3 + $0x28] sm:$0xff]
        %v528 = vld [vmem:[#allocation3 + $0x30] sm:$0xff]
        %v529 = vld [vmem:[#allocation3 + $0x38] sm:$0xff]
        %v530 = vmul.f32 %v443, %v522
        %v531 = vmul.f32 %v445, %v523
        %v532 = vmul.f32 %v447, %v524
        %v533 = vmul.f32 %v449, %v525
        %v534 = vmul.f32 %v451, %v526
        %v535 = vmul.f32 %v453, %v527
        %v536 = vmul.f32 %v455, %v528
        %v537 = vmul.f32 %v457, %v529
        %v538 = vsel %vm401, %v507, 0.0
        %539 = vadd.xlane.f32.xlu0 %v538
        %v540 = vpop.xlane.xlu0 %539
        %v541 = vsel %vm401, %v509, 0.0
        %542 = vadd.xlane.f32.xlu0 %v541
        %v543 = vpop.xlane.xlu0 %542
        %v544 = vsel %vm401, %v511, 0.0
        %545 = vadd.xlane.f32.xlu0 %v544
        %v546 = vpop.xlane.xlu0 %545
        %v547 = vsel %vm401, %v513, 0.0
        %548 = vadd.xlane.f32.xlu0 %v547
        %v549 = vpop.xlane.xlu0 %548
        %v550 = vsel %vm401, %v515, 0.0
        %551 = vadd.xlane.f32.xlu0 %v550
        %v552 = vpop.xlane.xlu0 %551
        %v553 = vsel %vm401, %v517, 0.0
        %554 = vadd.xlane.f32.xlu0 %v553
        %v555 = vpop.xlane.xlu0 %554
        %v556 = vsel %vm401, %v519, 0.0
        %557 = vadd.xlane.f32.xlu0 %v556
        %v558 = vpop.xlane.xlu0 %557
        %v559 = vsel %vm401, %v521, 0.0
        %560 = vadd.xlane.f32.xlu0 %v559
        %v561 = vpop.xlane.xlu0 %560
        %v562 = vadd.f32 %v530, %v540
        %v563 = vadd.f32 %v531, %v543
        %v564 = vadd.f32 %v532, %v546
        %v565 = vadd.f32 %v533, %v549
        %v566 = vadd.f32 %v534, %v552
        %v567 = vadd.f32 %v535, %v555
        %v568 = vadd.f32 %v536, %v558
        %v569 = vadd.f32 %v537, %v561
        %vm570 = vcmask 7168
        %571 = vst.msk [vmem:[#allocation3] sm:$0xff] %vm570, %v562
        %572 = vst.msk [vmem:[#allocation3 + $0x8] sm:$0xff] %vm570, %v563
        %573 = vst.msk [vmem:[#allocation3 + $0x10] sm:$0xff] %vm570, %v564
        %574 = vst.msk [vmem:[#allocation3 + $0x18] sm:$0xff] %vm570, %v565
        %575 = vst.msk [vmem:[#allocation3 + $0x20] sm:$0xff] %vm570, %v566
        %576 = vst.msk [vmem:[#allocation3 + $0x28] sm:$0xff] %vm570, %v567
        %577 = vst.msk [vmem:[#allocation3 + $0x30] sm:$0xff] %vm570, %v568
        %578 = vst.msk [vmem:[#allocation3 + $0x38] sm:$0xff] %vm570, %v569
        %v579 = vld [vmem:[#allocation4] sm:$0xff]
        %v580 = vld [vmem:[#allocation4 + $0x8] sm:$0xff]
        %v581 = vld [vmem:[#allocation4 + $0x10] sm:$0xff]
        %v582 = vld [vmem:[#allocation4 + $0x18] sm:$0xff]
        %v583 = vld [vmem:[#allocation4 + $0x20] sm:$0xff]
        %v584 = vld [vmem:[#allocation4 + $0x28] sm:$0xff]
        %v585 = vld [vmem:[#allocation4 + $0x30] sm:$0xff]
        %v586 = vld [vmem:[#allocation4 + $0x38] sm:$0xff]
        %588 = vset.pattern.permute.xlu0 0
        %589 = vperm.xlu0 %588, %v443
        %v590 = vpop.permute.xlu0 %589
        %593 = vset.pattern.permute.xlu0 0
        %594 = vperm.xlu0 %593, %v445
        %v595 = vpop.permute.xlu0 %594
        %598 = vset.pattern.permute.xlu0 0
        %599 = vperm.xlu0 %598, %v447
        %v600 = vpop.permute.xlu0 %599
        %603 = vset.pattern.permute.xlu0 0
        %604 = vperm.xlu0 %603, %v449
        %v605 = vpop.permute.xlu0 %604
        %608 = vset.pattern.permute.xlu0 0
        %609 = vperm.xlu0 %608, %v451
        %v610 = vpop.permute.xlu0 %609
        %613 = vset.pattern.permute.xlu0 0
        %614 = vperm.xlu0 %613, %v453
        %v615 = vpop.permute.xlu0 %614
        %618 = vset.pattern.permute.xlu0 0
        %619 = vperm.xlu0 %618, %v455
        %v620 = vpop.permute.xlu0 %619
        %623 = vset.pattern.permute.xlu0 0
        %624 = vperm.xlu0 %623, %v457
        %v625 = vpop.permute.xlu0 %624
        %v627 = vmul.f32 %v590, %v579
        %v628 = vmul.f32 %v595, %v580
        %v629 = vmul.f32 %v600, %v581
        %v630 = vmul.f32 %v605, %v582
        %v631 = vmul.f32 %v610, %v583
        %v632 = vmul.f32 %v615, %v584
        %v633 = vmul.f32 %v620, %v585
        %v634 = vmul.f32 %v625, %v586
        %v636 = vsel %vm401, %v507, 0
        %v639 = vsel %vm401, %v509, 0
        %v642 = vsel %vm401, %v511, 0
        %v645 = vsel %vm401, %v513, 0
        %v648 = vsel %vm401, %v515, 0
        %v651 = vsel %vm401, %v517, 0
        %v654 = vsel %vm401, %v519, 0
        %v657 = vsel %vm401, %v521, 0
        %659 = vmatpush.msra.mxu0 0.0
        %660 = vmatpush.msra.mxu0 0.0
        %661 = vmatpush.msra.mxu0 0.0
        %662 = vmatpush.msra.mxu0 0.0
        %663 = vmatpush.msra.mxu0 0.0
        %664 = vmatpush.msra.mxu0 0.0
        %665 = vmatpush.msra.mxu0 0.0
        %666 = vmatpush.msra.mxu0 0.0
        %667 = vmatpush.msra.mxu0 0.0
        %668 = vmatpush.msra.mxu0 0.0
        %669 = vmatpush.msra.mxu0 0.0
        %670 = vmatpush.msra.mxu0 0.0
        %671 = vmatpush.msra.mxu0 0.0
        %672 = vmatpush.msra.mxu0 0.0
        %673 = vmatpush.msra.mxu0 0.0
        %674 = vmatpush.msra.mxu0 %v323
        %675 = vmatmul.f32.gmra.mxu0 %v636
        %v676 = vpop.f32.mrf.mxu0
        %v677 = vadd.f32 0.0, %v676
        %678 = vmatmul.f32.gmra.mxu0 %v639
        %v679 = vpop.f32.mrf.mxu0
        %v680 = vadd.f32 0.0, %v679
        %681 = vmatmul.f32.gmra.mxu0 %v642
        %v682 = vpop.f32.mrf.mxu0
        %v683 = vadd.f32 0.0, %v682
        %684 = vmatmul.f32.gmra.mxu0 %v645
        %v685 = vpop.f32.mrf.mxu0
        %v686 = vadd.f32 0.0, %v685
        %687 = vmatmul.f32.gmra.mxu0 %v648
        %v688 = vpop.f32.mrf.mxu0
        %v689 = vadd.f32 0.0, %v688
        %690 = vmatmul.f32.gmra.mxu0 %v651
        %v691 = vpop.f32.mrf.mxu0
        %v692 = vadd.f32 0.0, %v691
        %693 = vmatmul.f32.gmra.mxu0 %v654
        %v694 = vpop.f32.mrf.mxu0
        %v695 = vadd.f32 0.0, %v694
        %696 = vmatmul.f32.gmra.mxu0 %v657
        %v697 = vpop.f32.mrf.mxu0
        %v698 = vadd.f32 0.0, %v697
        %699 = vdwg.mxu0
        %v700 = vadd.f32 %v627, %v677
        %v701 = vadd.f32 %v628, %v680
        %v702 = vadd.f32 %v629, %v683
        %v703 = vadd.f32 %v630, %v686
        %v704 = vadd.f32 %v631, %v689
        %v705 = vadd.f32 %v632, %v692
        %v706 = vadd.f32 %v633, %v695
        %v707 = vadd.f32 %v634, %v698
        %708 = vst.msk [vmem:[#allocation4] sm:$0xff] %vm324, %v700
        %709 = vst.msk [vmem:[#allocation4 + $0x8] sm:$0xff] %vm324, %v701
        %710 = vst.msk [vmem:[#allocation4 + $0x10] sm:$0xff] %vm324, %v702
        %711 = vst.msk [vmem:[#allocation4 + $0x18] sm:$0xff] %vm324, %v703
        %712 = vst.msk [vmem:[#allocation4 + $0x20] sm:$0xff] %vm324, %v704
        %713 = vst.msk [vmem:[#allocation4 + $0x28] sm:$0xff] %vm324, %v705
        %714 = vst.msk [vmem:[#allocation4 + $0x30] sm:$0xff] %vm324, %v706
        %715 = vst.msk [vmem:[#allocation4 + $0x38] sm:$0xff] %vm324, %v707
        %716 = vst.msk [vmem:[#allocation2] sm:$0xff] %vm570, %v426
        %717 = vst.msk [vmem:[#allocation2 + $0x8] sm:$0xff] %vm570, %v427
        %718 = vst.msk [vmem:[#allocation2 + $0x10] sm:$0xff] %vm570, %v428
        %719 = vst.msk [vmem:[#allocation2 + $0x18] sm:$0xff] %vm570, %v429
        %720 = vst.msk [vmem:[#allocation2 + $0x20] sm:$0xff] %vm570, %v430
        %721 = vst.msk [vmem:[#allocation2 + $0x28] sm:$0xff] %vm570, %v431
        %722 = vst.msk [vmem:[#allocation2 + $0x30] sm:$0xff] %vm570, %v432
        %723 = vst.msk [vmem:[#allocation2 + $0x38] sm:$0xff] %vm570, %v433
        // Predicated region
        $region41: #{tpu_custom_call.1} parent=35 // pred_check
          %p724 = pneg %p284
        $region42: #{tpu_custom_call.1} parent=35 // pred_check_branch
          %726 = sbr.rel (%p724) target = $region44
        $region43: #{tpu_custom_call.1} parent=35 // pred_region
          %v727 = vld [vmem:[#allocation4] sm:$0xff]
          %v728 = vld [vmem:[#allocation4 + $0x8] sm:$0xff]
          %v729 = vld [vmem:[#allocation4 + $0x10] sm:$0xff]
          %v730 = vld [vmem:[#allocation4 + $0x18] sm:$0xff]
          %v731 = vld [vmem:[#allocation4 + $0x20] sm:$0xff]
          %v732 = vld [vmem:[#allocation4 + $0x28] sm:$0xff]
          %v733 = vld [vmem:[#allocation4 + $0x30] sm:$0xff]
          %v734 = vld [vmem:[#allocation4 + $0x38] sm:$0xff]
          %v735 = vld [vmem:[#allocation3] sm:$0xff]
          %v736 = vld [vmem:[#allocation3 + $0x8] sm:$0xff]
          %v737 = vld [vmem:[#allocation3 + $0x10] sm:$0xff]
          %v738 = vld [vmem:[#allocation3 + $0x18] sm:$0xff]
          %v739 = vld [vmem:[#allocation3 + $0x20] sm:$0xff]
          %v740 = vld [vmem:[#allocation3 + $0x28] sm:$0xff]
          %v741 = vld [vmem:[#allocation3 + $0x30] sm:$0xff]
          %v742 = vld [vmem:[#allocation3 + $0x38] sm:$0xff]
          %v743 = vrcp.pop %v735
          %v744 = vrcp.pop %v736
          %v745 = vrcp.pop %v737
          %v746 = vrcp.pop %v738
          %v747 = vrcp.pop %v739
          %v748 = vrcp.pop %v740
          %v749 = vrcp.pop %v741
          %v750 = vrcp.pop %v742
          %752 = vset.pattern.permute.xlu0 0
          %753 = vperm.xlu0 %752, %v743
          %v754 = vpop.permute.xlu0 %753
          %757 = vset.pattern.permute.xlu0 0
          %758 = vperm.xlu0 %757, %v744
          %v759 = vpop.permute.xlu0 %758
          %762 = vset.pattern.permute.xlu0 0
          %763 = vperm.xlu0 %762, %v745
          %v764 = vpop.permute.xlu0 %763
          %767 = vset.pattern.permute.xlu0 0
          %768 = vperm.xlu0 %767, %v746
          %v769 = vpop.permute.xlu0 %768
          %772 = vset.pattern.permute.xlu0 0
          %773 = vperm.xlu0 %772, %v747
          %v774 = vpop.permute.xlu0 %773
          %777 = vset.pattern.permute.xlu0 0
          %778 = vperm.xlu0 %777, %v748
          %v779 = vpop.permute.xlu0 %778
          %782 = vset.pattern.permute.xlu0 0
          %783 = vperm.xlu0 %782, %v749
          %v784 = vpop.permute.xlu0 %783
          %787 = vset.pattern.permute.xlu0 0
          %788 = vperm.xlu0 %787, %v750
          %v789 = vpop.permute.xlu0 %788
          %v791 = vmul.f32 %v727, %v754
          %v792 = vmul.f32 %v728, %v759
          %v793 = vmul.f32 %v729, %v764
          %v794 = vmul.f32 %v730, %v769
          %v795 = vmul.f32 %v731, %v774
          %v796 = vmul.f32 %v732, %v779
          %v797 = vmul.f32 %v733, %v784
          %v798 = vmul.f32 %v734, %v789
          %800 = vrot.lane.b32.xlu0 %v792, 16
          %v801 = vpop.permute.xlu0 %800
          %804 = vrot.lane.b32.xlu0 %v793, 32
          %v805 = vpop.permute.xlu0 %804
          %808 = vrot.lane.b32.xlu0 %v794, 48
          %v809 = vpop.permute.xlu0 %808
          %812 = vrot.lane.b32.xlu0 %v795, 64
          %v813 = vpop.permute.xlu0 %812
          %816 = vrot.lane.b32.xlu0 %v796, 80
          %v817 = vpop.permute.xlu0 %816
          %820 = vrot.lane.b32.xlu0 %v797, 96
          %v821 = vpop.permute.xlu0 %820
          %824 = vrot.lane.b32.xlu0 %v798, 112
          %v825 = vpop.permute.xlu0 %824
          %v827 = vsel %vm324, %v791, %v801
          %vm828 = vcmask 261120
          %v829 = vsel %vm828, %v827, %v805
          %vm830 = vcmask 392192
          %v831 = vsel %vm830, %v829, %v809
          %vm832 = vcmask 523264
          %v833 = vsel %vm832, %v831, %v813
          %vm834 = vcmask 654336
          %v835 = vsel %vm834, %v833, %v817
          %vm836 = vcmask 785408
          %v837 = vsel %vm836, %v835, %v821
          %vm838 = vcmask 916480
          %v839 = vsel %vm838, %v837, %v825
          %v840 = vld [vmem:[%s3] sm:$0xff]
          %v841 = vld [vmem:[%s3 + $0x8] sm:$0xff]
          %v842 = vld [vmem:[%s3 + $0x10] sm:$0xff]
          %v843 = vld [vmem:[%s3 + $0x18] sm:$0xff]
          %v844 = vld [vmem:[%s3 + $0x20] sm:$0xff]
          %v845 = vld [vmem:[%s3 + $0x28] sm:$0xff]
          %v846 = vld [vmem:[%s3 + $0x30] sm:$0xff]
          %v847 = vld [vmem:[%s3 + $0x38] sm:$0xff]
          %v848 = vld [vmem:[%s3 + $0x40] sm:$0xff]
          %v849 = vld [vmem:[%s3 + $0x48] sm:$0xff]
          %v850 = vld [vmem:[%s3 + $0x50] sm:$0xff]
          %v851 = vld [vmem:[%s3 + $0x58] sm:$0xff]
          %v852 = vld [vmem:[%s3 + $0x60] sm:$0xff]
          %v853 = vld [vmem:[%s3 + $0x68] sm:$0xff]
          %v854 = vld [vmem:[%s3 + $0x70] sm:$0xff]
          %v855 = vld [vmem:[%s3 + $0x78] sm:$0xff]
          %856 = vmatpush.msra.mxu0 %v855
          %857 = vmatpush.msra.mxu0 %v854
          %858 = vmatpush.msra.mxu0 %v853
          %859 = vmatpush.msra.mxu0 %v852
          %860 = vmatpush.msra.mxu0 %v851
          %861 = vmatpush.msra.mxu0 %v850
          %862 = vmatpush.msra.mxu0 %v849
          %863 = vmatpush.msra.mxu0 %v848
          %864 = vmatpush.msra.mxu0 %v847
          %865 = vmatpush.msra.mxu0 %v846
          %866 = vmatpush.msra.mxu0 %v845
          %867 = vmatpush.msra.mxu0 %v844
          %868 = vmatpush.msra.mxu0 %v843
          %869 = vmatpush.msra.mxu0 %v842
          %870 = vmatpush.msra.mxu0 %v841
          %871 = vmatpush.msra.mxu0 %v840
          %872 = vmatmul.f32.gmra.mxu0 %v839
          %v873 = vpop.f32.mrf.mxu0
          %v874 = vadd.f32 0.0, %v873
          %875 = vdwg.mxu0
          %876 = vst.msk [vmem:[%s261] sm:$0xff] %vm828, %v874
        $region44: #{tpu_custom_call.1} parent=35 // pred_fallthru
          _
        %s877 = sand.u32 %s152, 1
        %s878 = scalar_lea.sflag [#allocation6], %s877
        %s879 = sand.u32 %s152, 1
        %s880 = smul.addr %s879, 8
        %s881 = scalar_lea.vmem [#allocation5], %s880
        // Predicated region
        $region45: #{tpu_custom_call.1} parent=35 // pred_check
          %p882 = pneg %p162
        $region46: #{tpu_custom_call.1} parent=35 // pred_check_branch
          %884 = sbr.rel (%p882) target = $region48
        $region47: #{tpu_custom_call.1} parent=35 // pred_region
          %886 = vsyncadd %s878, 0
          %s887 = sadd.s32 %s24, %s23
          %s888 = smul.addr %s887, 8
          %s889 = scalar_lea.hbm %s4, %s888
          %s891 = sshll.u32 %s881, 4
          %s892 = int_to_ptr.vmem [resolvable:$true] %s891
          %s893 = sshll.u32 %s889, 4
          %s894 = int_to_ptr.hbm [resolvable:$true] %s893
          %896 = dma.vmem_to_hbm [thread:$0]  %s892, 128, %s894, %s878
        $region48: #{tpu_custom_call.1} parent=35 // pred_fallthru
          _
      $region36: #{tpu_custom_call.1} parent=5 // pred_fallthru
        _
      %p897 = scmp.le.s32.totalorder 2, %s13
      // Predicated region
      $region49: #{tpu_custom_call.1} parent=5 // pred_check
        %p898 = pneg %p897
      $region50: #{tpu_custom_call.1} parent=5 // pred_check_branch
        %900 = sbr.rel (%p898) target = $region52
      $region51: #{tpu_custom_call.1} parent=5 // pred_region
        %s901 = ssub.s32 %s13, 2
        // Predicated region
        $region53: #{tpu_custom_call.1} parent=51 // pred_check
          %p902 = pneg %p168
        $region54: #{tpu_custom_call.1} parent=51 // pred_check_branch
          %904 = sbr.rel (%p902) target = $region56
        $region55: #{tpu_custom_call.1} parent=51 // pred_region
          %s905 = sand.u32 %s153, 1
          %s906 = scalar_lea.sflag [#allocation6], %s905
          %s907 = sand.u32 %s153, 1
          %s908 = smul.addr %s907, 8
          %s909 = scalar_lea.vmem [#allocation5], %s908
          %911 = dma.done %s906, 128
        $region56: #{tpu_custom_call.1} parent=51 // pred_fallthru
          _
      $region52: #{tpu_custom_call.1} parent=5 // pred_fallthru
        _
    $region6: #{tpu_custom_call.1} parent=1 // loop_footer
      %s17 = sadd.s32 1, %s13
    $region7: #{tpu_custom_call.1} parent=1 // loop_footer_branch
      %12 = sbr.rel target = $region3
    $region8: #{tpu_custom_call.1} parent=1 // loop_exit
      _
    %912 = vsyncpa [#allocation6], 1
    %s913 = scalar_lea.sflag [#allocation6], 1
    %914 = vsyncpa %s913, 1

</llo_original>
